<compile_context>
chip_gen: v7x
topology: tpu7x:2x2x1
jax: 0.10.0
libtpu: 0.0.40
codegen_flags: <defaults>
</compile_context>

<pallas_src>
import functools

import jax
import jax.numpy as jnp
from jax.experimental import pallas as pl
from jax.experimental.pallas import tpu as pltpu


def _unfold_kernel(x_ref, o_ref, t0_ref, stage_ref, *, patch, n_h, n_w, planes):
    # x_ref    : (k, H, W)       chunk of image planes
    # o_ref    : (k, p*p, L)     lane-dense unfolded output, L = n_h * n_w
    # t0_ref   : (W, H)  scratch transposed plane
    # stage_ref: (p*p, L) scratch output staged with rows ordered (j, i)
    p = patch

    for n in range(planes):
        # Pass 1: transpose the plane so W (-> pw, j) lands on sublanes, which
        # makes the within-patch column peel a cheap sublane-strided read.
        t0_ref[...] = x_ref[n].T                                   # (W, H)

        # Pass 2: for each within-patch column j, peel rows pw*p + j of t0
        # (-> (nW, H)), transpose back (-> (H, nW), lanes = pw) and scatter the
        # nH contiguous row bands into the staging block:
        #   stage[j*p + i, ph*nW + pw] = x[ph*p + i, pw*p + j]
        for j in range(p):
            u = t0_ref[pl.ds(j, n_w, stride=p), :].T               # (H, nW)
            for ph in range(n_h):
                stage_ref[pl.ds(j * p, p), pl.ds(ph * n_w, n_w)] = (
                    u[ph * p:(ph + 1) * p, :]
                )

        # Pass 3: reorder rows (j, i) -> (i, j).  Every store to the output
        # block is a full-width (p, L) slab, so the writeback is lane-dense.
        for i in range(p):
            o_ref[n, pl.ds(i * p, p), :] = stage_ref[pl.ds(i, p, stride=p), :]


def _choose_planes_per_step(n_planes: int, plane_block_bytes: int) -> int:
    """Largest divisor of n_planes whose double-buffered blocks fit a safe budget."""
    budget = 6 * 1024 * 1024            # keeps total VMEM well under v5e's 16 MiB default
    per_plane = 2 * plane_block_bytes   # double-buffered input + output blocks
    max_k = max(1, budget // max(per_plane, 1))
    best = 1
    for k in range(1, n_planes + 1):
        if n_planes % k != 0 or k > max_k:
            continue
        if n_planes // k >= 2 or n_planes == 1:   # keep >= 2 grid steps for pipelining
            best = k
    return best


def unfold(x: jax.Array, patch_size: int) -> jax.Array:
    """Pallas equivalent of nn.Unfold(kernel_size=p, stride=p) on (B, C, H, W)."""
    B, C, H, W = x.shape
    p = int(patch_size)
    n_h, n_w = H // p, W // p
    L = n_h * n_w
    if n_h < 1 or n_w < 1:
        raise ValueError("patch_size larger than spatial dims")

    N = B * C
    itemsize = jnp.dtype(x.dtype).itemsize
    plane_in = H * W * itemsize
    plane_out = p * p * L * itemsize
    k = _choose_planes_per_step(N, plane_in + plane_out)

    kernel = functools.partial(
        _unfold_kernel, patch=p, n_h=n_h, n_w=n_w, planes=k
    )

    cost = pl.CostEstimate(
        flops=0,
        transcendentals=0,
        bytes_accessed=int(N * (plane_in + plane_out)),
    )

    # Flatten (B, C) -> one parallel axis (free reshape).
    x3 = x.reshape(N, H, W)

    out3 = pl.pallas_call(
        kernel,
        out_shape=jax.ShapeDtypeStruct((N, p * p, L), x.dtype),
        grid_spec=pltpu.PrefetchScalarGridSpec(
            num_scalar_prefetch=0,
            grid=(N // k,),
            in_specs=[
                # Last two dims equal the full array dims -> layout-legal block.
                pl.BlockSpec((k, H, W), lambda n: (n, 0, 0)),
            ],
            out_specs=pl.BlockSpec((k, p * p, L), lambda n: (n, 0, 0)),
            scratch_shapes=[
                pltpu.VMEM((W, H), x.dtype),        # transposed plane
                pltpu.VMEM((p * p, L), x.dtype),    # (j, i)-ordered staging block
            ],
        ),
        compiler_params=pltpu.CompilerParams(
            dimension_semantics=("parallel",),
        ),
        cost_estimate=cost,
    )(x3)

    # Row-major collapse (B*C, p*p, L) -> (B, C*p*p, L) is a free reshape and
    # matches torch.nn.Unfold's output layout exactly.
    return out3.reshape(B, C * p * p, L)


def _unfold_reference(x: jax.Array, p: int) -> jax.Array:
    """Pure-JAX mirror of nn.Unfold(kernel_size=p, stride=p)."""
    B, C, H, W = x.shape
    n_h, n_w = H // p, W // p
    x = x[:, :, : n_h * p, : n_w * p]
    x = x.reshape(B, C, n_h, p, n_w, p)
    x = jnp.transpose(x, (0, 1, 3, 5, 2, 4))  # (B, C, p, p, nH, nW)
    return x.reshape(B, C * p * p, n_h * n_w)


if __name__ == "__main__":
    # Small shapes consistent with the module: RGB images, square patches.
    B, C, H, W = 2, 3, 16, 16
    patch = 4

    key = jax.random.PRNGKey(0)
    x = jax.random.normal(key, (B, C, H, W), dtype=jnp.float32)

    out = jax.block_until_ready(unfold(x, patch))
    ref = _unfold_reference(x, patch)
    assert out.shape == (B, C * patch * patch, (H // patch) * (W // patch))
    assert jnp.array_equal(out, ref), "mismatch vs reference unfold (square)"

    # Rectangular, non-divisible spatial dims exercise the implicit trim path.
    x2 = jax.random.normal(jax.random.PRNGKey(1), (2, 3, 18, 12), dtype=jnp.float32)
    out2 = jax.block_until_ready(unfold(x2, patch))
    assert jnp.array_equal(out2, _unfold_reference(x2, patch)), "mismatch (rect)"

    print("KERNEL_OK")
</pallas_src>

<mosaic_0001>
module attributes {stable_mosaic.version = 11 : i64} {
  func.func @_unfold_kernel(%arg0: i32, %arg1: memref<3x16x16xf32, #tpu.memory_space<vmem>>, %arg2: memref<3x16x16xf32, #tpu.memory_space<vmem>>, %arg3: memref<16x16xf32, #tpu.memory_space<vmem>>, %arg4: memref<16x16xf32, #tpu.memory_space<vmem>>) attributes {dimension_semantics = [#tpu.dimension_semantics<parallel>], iteration_bounds = array<i64: 2>, scalar_prefetch = 0 : i64, scratch_operands = 2 : i64, tpu.core_type = #tpu.core_type<tc>, window_params = [{transform_indices = @transform_0, window_bounds = array<i64: 3, 16, 16>}, {transform_indices = @transform_1, window_bounds = array<i64: 3, 16, 16>}]} {
    %c0 = arith.constant 0 : index
    %c0_0 = arith.constant 0 : index
    %c0_1 = arith.constant 0 : index
    %0 = vector.load %arg1[%c0, %c0_0, %c0_1] : memref<3x16x16xf32, #tpu.memory_space<vmem>>, vector<1x16x16xf32>
    %1 = vector.shape_cast %0 : vector<1x16x16xf32> to vector<16x16xf32>
    %2 = tpu.transpose %1, [1, 0] : vector<16x16xf32> -> vector<16x16xf32>
    %c0_2 = arith.constant 0 : index
    %c0_3 = arith.constant 0 : index
    %3 = vector.load %arg3[%c0_2, %c0_3] : memref<16x16xf32, #tpu.memory_space<vmem>>, vector<16x16xf32>
    tpu.vector_store %arg3[%c0_2, %c0_3], %2 {strides = array<i32>} : memref<16x16xf32, #tpu.memory_space<vmem>>, vector<16x16xf32>,
    %c0_4 = arith.constant 0 : index
    %c0_5 = arith.constant 0 : index
    %4 = tpu.strided_load %arg3[%c0_4, %c0_5] {strides = array<i32: 4, 1>} : memref<16x16xf32, #tpu.memory_space<vmem>>, vector<4x16xf32>
    %5 = tpu.transpose %4, [1, 0] : vector<4x16xf32> -> vector<16x4xf32>
    %6 = vector.extract_strided_slice %5 {offsets = [0, 0], sizes = [4, 4], strides = [1, 1]} : vector<16x4xf32> to vector<4x4xf32>
    %c0_6 = arith.constant 0 : index
    %c0_7 = arith.constant 0 : index
    %7 = vector.load %arg4[%c0_6, %c0_7] : memref<16x16xf32, #tpu.memory_space<vmem>>, vector<4x4xf32>
    tpu.vector_store %arg4[%c0_6, %c0_7], %6 {strides = array<i32>} : memref<16x16xf32, #tpu.memory_space<vmem>>, vector<4x4xf32>,
    %8 = vector.extract_strided_slice %5 {offsets = [4, 0], sizes = [4, 4], strides = [1, 1]} : vector<16x4xf32> to vector<4x4xf32>
    %c0_8 = arith.constant 0 : index
    %c4 = arith.constant 4 : index
    %9 = vector.load %arg4[%c0_8, %c4] : memref<16x16xf32, #tpu.memory_space<vmem>>, vector<4x4xf32>
    tpu.vector_store %arg4[%c0_8, %c4], %8 {strides = array<i32>} : memref<16x16xf32, #tpu.memory_space<vmem>>, vector<4x4xf32>,
    %10 = vector.extract_strided_slice %5 {offsets = [8, 0], sizes = [4, 4], strides = [1, 1]} : vector<16x4xf32> to vector<4x4xf32>
    %c0_9 = arith.constant 0 : index
    %c8 = arith.constant 8 : index
    %11 = vector.load %arg4[%c0_9, %c8] : memref<16x16xf32, #tpu.memory_space<vmem>>, vector<4x4xf32>
    tpu.vector_store %arg4[%c0_9, %c8], %10 {strides = array<i32>} : memref<16x16xf32, #tpu.memory_space<vmem>>, vector<4x4xf32>,
    %12 = vector.extract_strided_slice %5 {offsets = [12, 0], sizes = [4, 4], strides = [1, 1]} : vector<16x4xf32> to vector<4x4xf32>
    %c0_10 = arith.constant 0 : index
    %c12 = arith.constant 12 : index
    %13 = vector.load %arg4[%c0_10, %c12] : memref<16x16xf32, #tpu.memory_space<vmem>>, vector<4x4xf32>
    tpu.vector_store %arg4[%c0_10, %c12], %12 {strides = array<i32>} : memref<16x16xf32, #tpu.memory_space<vmem>>, vector<4x4xf32>,
    %c1 = arith.constant 1 : index
    %c0_11 = arith.constant 0 : index
    %14 = tpu.strided_load %arg3[%c1, %c0_11] {strides = array<i32: 4, 1>} : memref<16x16xf32, #tpu.memory_space<vmem>>, vector<4x16xf32>
    %15 = tpu.transpose %14, [1, 0] : vector<4x16xf32> -> vector<16x4xf32>
    %16 = vector.extract_strided_slice %15 {offsets = [0, 0], sizes = [4, 4], strides = [1, 1]} : vector<16x4xf32> to vector<4x4xf32>
    %c4_12 = arith.constant 4 : index
    %c0_13 = arith.constant 0 : index
    %17 = vector.load %arg4[%c4_12, %c0_13] : memref<16x16xf32, #tpu.memory_space<vmem>>, vector<4x4xf32>
    tpu.vector_store %arg4[%c4_12, %c0_13], %16 {strides = array<i32>} : memref<16x16xf32, #tpu.memory_space<vmem>>, vector<4x4xf32>,
    %18 = vector.extract_strided_slice %15 {offsets = [4, 0], sizes = [4, 4], strides = [1, 1]} : vector<16x4xf32> to vector<4x4xf32>
    %c4_14 = arith.constant 4 : index
    %c4_15 = arith.constant 4 : index
    %19 = vector.load %arg4[%c4_14, %c4_15] : memref<16x16xf32, #tpu.memory_space<vmem>>, vector<4x4xf32>
    tpu.vector_store %arg4[%c4_14, %c4_15], %18 {strides = array<i32>} : memref<16x16xf32, #tpu.memory_space<vmem>>, vector<4x4xf32>,
    %20 = vector.extract_strided_slice %15 {offsets = [8, 0], sizes = [4, 4], strides = [1, 1]} : vector<16x4xf32> to vector<4x4xf32>
    %c4_16 = arith.constant 4 : index
    %c8_17 = arith.constant 8 : index
    %21 = vector.load %arg4[%c4_16, %c8_17] : memref<16x16xf32, #tpu.memory_space<vmem>>, vector<4x4xf32>
    tpu.vector_store %arg4[%c4_16, %c8_17], %20 {strides = array<i32>} : memref<16x16xf32, #tpu.memory_space<vmem>>, vector<4x4xf32>,
    %22 = vector.extract_strided_slice %15 {offsets = [12, 0], sizes = [4, 4], strides = [1, 1]} : vector<16x4xf32> to vector<4x4xf32>
    %c4_18 = arith.constant 4 : index
    %c12_19 = arith.constant 12 : index
    %23 = vector.load %arg4[%c4_18, %c12_19] : memref<16x16xf32, #tpu.memory_space<vmem>>, vector<4x4xf32>
    tpu.vector_store %arg4[%c4_18, %c12_19], %22 {strides = array<i32>} : memref<16x16xf32, #tpu.memory_space<vmem>>, vector<4x4xf32>,
    %c2 = arith.constant 2 : index
    %c0_20 = arith.constant 0 : index
    %24 = tpu.strided_load %arg3[%c2, %c0_20] {strides = array<i32: 4, 1>} : memref<16x16xf32, #tpu.memory_space<vmem>>, vector<4x16xf32>
    %25 = tpu.transpose %24, [1, 0] : vector<4x16xf32> -> vector<16x4xf32>
    %26 = vector.extract_strided_slice %25 {offsets = [0, 0], sizes = [4, 4], strides = [1, 1]} : vector<16x4xf32> to vector<4x4xf32>
    %c8_21 = arith.constant 8 : index
    %c0_22 = arith.constant 0 : index
    %27 = vector.load %arg4[%c8_21, %c0_22] : memref<16x16xf32, #tpu.memory_space<vmem>>, vector<4x4xf32>
    tpu.vector_store %arg4[%c8_21, %c0_22], %26 {strides = array<i32>} : memref<16x16xf32, #tpu.memory_space<vmem>>, vector<4x4xf32>,
    %28 = vector.extract_strided_slice %25 {offsets = [4, 0], sizes = [4, 4], strides = [1, 1]} : vector<16x4xf32> to vector<4x4xf32>
    %c8_23 = arith.constant 8 : index
    %c4_24 = arith.constant 4 : index
    %29 = vector.load %arg4[%c8_23, %c4_24] : memref<16x16xf32, #tpu.memory_space<vmem>>, vector<4x4xf32>
    tpu.vector_store %arg4[%c8_23, %c4_24], %28 {strides = array<i32>} : memref<16x16xf32, #tpu.memory_space<vmem>>, vector<4x4xf32>,
    %30 = vector.extract_strided_slice %25 {offsets = [8, 0], sizes = [4, 4], strides = [1, 1]} : vector<16x4xf32> to vector<4x4xf32>
    %c8_25 = arith.constant 8 : index
    %c8_26 = arith.constant 8 : index
    %31 = vector.load %arg4[%c8_25, %c8_26] : memref<16x16xf32, #tpu.memory_space<vmem>>, vector<4x4xf32>
    tpu.vector_store %arg4[%c8_25, %c8_26], %30 {strides = array<i32>} : memref<16x16xf32, #tpu.memory_space<vmem>>, vector<4x4xf32>,
    %32 = vector.extract_strided_slice %25 {offsets = [12, 0], sizes = [4, 4], strides = [1, 1]} : vector<16x4xf32> to vector<4x4xf32>
    %c8_27 = arith.constant 8 : index
    %c12_28 = arith.constant 12 : index
    %33 = vector.load %arg4[%c8_27, %c12_28] : memref<16x16xf32, #tpu.memory_space<vmem>>, vector<4x4xf32>
    tpu.vector_store %arg4[%c8_27, %c12_28], %32 {strides = array<i32>} : memref<16x16xf32, #tpu.memory_space<vmem>>, vector<4x4xf32>,
    %c3 = arith.constant 3 : index
    %c0_29 = arith.constant 0 : index
    %34 = tpu.strided_load %arg3[%c3, %c0_29] {strides = array<i32: 4, 1>} : memref<16x16xf32, #tpu.memory_space<vmem>>, vector<4x16xf32>
    %35 = tpu.transpose %34, [1, 0] : vector<4x16xf32> -> vector<16x4xf32>
    %36 = vector.extract_strided_slice %35 {offsets = [0, 0], sizes = [4, 4], strides = [1, 1]} : vector<16x4xf32> to vector<4x4xf32>
    %c12_30 = arith.constant 12 : index
    %c0_31 = arith.constant 0 : index
    %37 = vector.load %arg4[%c12_30, %c0_31] : memref<16x16xf32, #tpu.memory_space<vmem>>, vector<4x4xf32>
    tpu.vector_store %arg4[%c12_30, %c0_31], %36 {strides = array<i32>} : memref<16x16xf32, #tpu.memory_space<vmem>>, vector<4x4xf32>,
    %38 = vector.extract_strided_slice %35 {offsets = [4, 0], sizes = [4, 4], strides = [1, 1]} : vector<16x4xf32> to vector<4x4xf32>
    %c12_32 = arith.constant 12 : index
    %c4_33 = arith.constant 4 : index
    %39 = vector.load %arg4[%c12_32, %c4_33] : memref<16x16xf32, #tpu.memory_space<vmem>>, vector<4x4xf32>
    tpu.vector_store %arg4[%c12_32, %c4_33], %38 {strides = array<i32>} : memref<16x16xf32, #tpu.memory_space<vmem>>, vector<4x4xf32>,
    %40 = vector.extract_strided_slice %35 {offsets = [8, 0], sizes = [4, 4], strides = [1, 1]} : vector<16x4xf32> to vector<4x4xf32>
    %c12_34 = arith.constant 12 : index
    %c8_35 = arith.constant 8 : index
    %41 = vector.load %arg4[%c12_34, %c8_35] : memref<16x16xf32, #tpu.memory_space<vmem>>, vector<4x4xf32>
    tpu.vector_store %arg4[%c12_34, %c8_35], %40 {strides = array<i32>} : memref<16x16xf32, #tpu.memory_space<vmem>>, vector<4x4xf32>,
    %42 = vector.extract_strided_slice %35 {offsets = [12, 0], sizes = [4, 4], strides = [1, 1]} : vector<16x4xf32> to vector<4x4xf32>
    %c12_36 = arith.constant 12 : index
    %c12_37 = arith.constant 12 : index
    %43 = vector.load %arg4[%c12_36, %c12_37] : memref<16x16xf32, #tpu.memory_space<vmem>>, vector<4x4xf32>
    tpu.vector_store %arg4[%c12_36, %c12_37], %42 {strides = array<i32>} : memref<16x16xf32, #tpu.memory_space<vmem>>, vector<4x4xf32>,
    %c0_38 = arith.constant 0 : index
    %c0_39 = arith.constant 0 : index
    %44 = tpu.strided_load %arg4[%c0_38, %c0_39] {strides = array<i32: 4, 1>} : memref<16x16xf32, #tpu.memory_space<vmem>>, vector<4x16xf32>
    %c0_40 = arith.constant 0 : index
    %c0_41 = arith.constant 0 : index
    %c0_42 = arith.constant 0 : index
    %45 = vector.load %arg2[%c0_40, %c0_41, %c0_42] : memref<3x16x16xf32, #tpu.memory_space<vmem>>, vector<1x4x16xf32>
    %46 = vector.shape_cast %45 : vector<1x4x16xf32> to vector<4x16xf32>
    %47 = vector.shape_cast %44 : vector<4x16xf32> to vector<1x4x16xf32>
    tpu.vector_store %arg2[%c0_40, %c0_41, %c0_42], %47 {strides = array<i32>} : memref<3x16x16xf32, #tpu.memory_space<vmem>>, vector<1x4x16xf32>,
    %c1_43 = arith.constant 1 : index
    %c0_44 = arith.constant 0 : index
    %48 = tpu.strided_load %arg4[%c1_43, %c0_44] {strides = array<i32: 4, 1>} : memref<16x16xf32, #tpu.memory_space<vmem>>, vector<4x16xf32>
    %c0_45 = arith.constant 0 : index
    %c4_46 = arith.constant 4 : index
    %c0_47 = arith.constant 0 : index
    %49 = vector.load %arg2[%c0_45, %c4_46, %c0_47] : memref<3x16x16xf32, #tpu.memory_space<vmem>>, vector<1x4x16xf32>
    %50 = vector.shape_cast %49 : vector<1x4x16xf32> to vector<4x16xf32>
    %51 = vector.shape_cast %48 : vector<4x16xf32> to vector<1x4x16xf32>
    tpu.vector_store %arg2[%c0_45, %c4_46, %c0_47], %51 {strides = array<i32>} : memref<3x16x16xf32, #tpu.memory_space<vmem>>, vector<1x4x16xf32>,
    %c2_48 = arith.constant 2 : index
    %c0_49 = arith.constant 0 : index
    %52 = tpu.strided_load %arg4[%c2_48, %c0_49] {strides = array<i32: 4, 1>} : memref<16x16xf32, #tpu.memory_space<vmem>>, vector<4x16xf32>
    %c0_50 = arith.constant 0 : index
    %c8_51 = arith.constant 8 : index
    %c0_52 = arith.constant 0 : index
    %53 = vector.load %arg2[%c0_50, %c8_51, %c0_52] : memref<3x16x16xf32, #tpu.memory_space<vmem>>, vector<1x4x16xf32>
    %54 = vector.shape_cast %53 : vector<1x4x16xf32> to vector<4x16xf32>
    %55 = vector.shape_cast %52 : vector<4x16xf32> to vector<1x4x16xf32>
    tpu.vector_store %arg2[%c0_50, %c8_51, %c0_52], %55 {strides = array<i32>} : memref<3x16x16xf32, #tpu.memory_space<vmem>>, vector<1x4x16xf32>,
    %c3_53 = arith.constant 3 : index
    %c0_54 = arith.constant 0 : index
    %56 = tpu.strided_load %arg4[%c3_53, %c0_54] {strides = array<i32: 4, 1>} : memref<16x16xf32, #tpu.memory_space<vmem>>, vector<4x16xf32>
    %c0_55 = arith.constant 0 : index
    %c12_56 = arith.constant 12 : index
    %c0_57 = arith.constant 0 : index
    %57 = vector.load %arg2[%c0_55, %c12_56, %c0_57] : memref<3x16x16xf32, #tpu.memory_space<vmem>>, vector<1x4x16xf32>
    %58 = vector.shape_cast %57 : vector<1x4x16xf32> to vector<4x16xf32>
    %59 = vector.shape_cast %56 : vector<4x16xf32> to vector<1x4x16xf32>
    tpu.vector_store %arg2[%c0_55, %c12_56, %c0_57], %59 {strides = array<i32>} : memref<3x16x16xf32, #tpu.memory_space<vmem>>, vector<1x4x16xf32>,
    %c1_58 = arith.constant 1 : index
    %c0_59 = arith.constant 0 : index
    %c0_60 = arith.constant 0 : index
    %60 = vector.load %arg1[%c1_58, %c0_59, %c0_60] : memref<3x16x16xf32, #tpu.memory_space<vmem>>, vector<1x16x16xf32>
    %61 = vector.shape_cast %60 : vector<1x16x16xf32> to vector<16x16xf32>
    %62 = tpu.transpose %61, [1, 0] : vector<16x16xf32> -> vector<16x16xf32>
    %c0_61 = arith.constant 0 : index
    %c0_62 = arith.constant 0 : index
    %63 = vector.load %arg3[%c0_61, %c0_62] : memref<16x16xf32, #tpu.memory_space<vmem>>, vector<16x16xf32>
    tpu.vector_store %arg3[%c0_61, %c0_62], %62 {strides = array<i32>} : memref<16x16xf32, #tpu.memory_space<vmem>>, vector<16x16xf32>,
    %c0_63 = arith.constant 0 : index
    %c0_64 = arith.constant 0 : index
    %64 = tpu.strided_load %arg3[%c0_63, %c0_64] {strides = array<i32: 4, 1>} : memref<16x16xf32, #tpu.memory_space<vmem>>, vector<4x16xf32>
    %65 = tpu.transpose %64, [1, 0] : vector<4x16xf32> -> vector<16x4xf32>
    %66 = vector.extract_strided_slice %65 {offsets = [0, 0], sizes = [4, 4], strides = [1, 1]} : vector<16x4xf32> to vector<4x4xf32>
    %c0_65 = arith.constant 0 : index
    %c0_66 = arith.constant 0 : index
    %67 = vector.load %arg4[%c0_65, %c0_66] : memref<16x16xf32, #tpu.memory_space<vmem>>, vector<4x4xf32>
    tpu.vector_store %arg4[%c0_65, %c0_66], %66 {strides = array<i32>} : memref<16x16xf32, #tpu.memory_space<vmem>>, vector<4x4xf32>,
    %68 = vector.extract_strided_slice %65 {offsets = [4, 0], sizes = [4, 4], strides = [1, 1]} : vector<16x4xf32> to vector<4x4xf32>
    %c0_67 = arith.constant 0 : index
    %c4_68 = arith.constant 4 : index
    %69 = vector.load %arg4[%c0_67, %c4_68] : memref<16x16xf32, #tpu.memory_space<vmem>>, vector<4x4xf32>
    tpu.vector_store %arg4[%c0_67, %c4_68], %68 {strides = array<i32>} : memref<16x16xf32, #tpu.memory_space<vmem>>, vector<4x4xf32>,
    %70 = vector.extract_strided_slice %65 {offsets = [8, 0], sizes = [4, 4], strides = [1, 1]} : vector<16x4xf32> to vector<4x4xf32>
    %c0_69 = arith.constant 0 : index
    %c8_70 = arith.constant 8 : index
    %71 = vector.load %arg4[%c0_69, %c8_70] : memref<16x16xf32, #tpu.memory_space<vmem>>, vector<4x4xf32>
    tpu.vector_store %arg4[%c0_69, %c8_70], %70 {strides = array<i32>} : memref<16x16xf32, #tpu.memory_space<vmem>>, vector<4x4xf32>,
    %72 = vector.extract_strided_slice %65 {offsets = [12, 0], sizes = [4, 4], strides = [1, 1]} : vector<16x4xf32> to vector<4x4xf32>
    %c0_71 = arith.constant 0 : index
    %c12_72 = arith.constant 12 : index
    %73 = vector.load %arg4[%c0_71, %c12_72] : memref<16x16xf32, #tpu.memory_space<vmem>>, vector<4x4xf32>
    tpu.vector_store %arg4[%c0_71, %c12_72], %72 {strides = array<i32>} : memref<16x16xf32, #tpu.memory_space<vmem>>, vector<4x4xf32>,
    %c1_73 = arith.constant 1 : index
    %c0_74 = arith.constant 0 : index
    %74 = tpu.strided_load %arg3[%c1_73, %c0_74] {strides = array<i32: 4, 1>} : memref<16x16xf32, #tpu.memory_space<vmem>>, vector<4x16xf32>
    %75 = tpu.transpose %74, [1, 0] : vector<4x16xf32> -> vector<16x4xf32>
    %76 = vector.extract_strided_slice %75 {offsets = [0, 0], sizes = [4, 4], strides = [1, 1]} : vector<16x4xf32> to vector<4x4xf32>
    %c4_75 = arith.constant 4 : index
    %c0_76 = arith.constant 0 : index
    %77 = vector.load %arg4[%c4_75, %c0_76] : memref<16x16xf32, #tpu.memory_space<vmem>>, vector<4x4xf32>
    tpu.vector_store %arg4[%c4_75, %c0_76], %76 {strides = array<i32>} : memref<16x16xf32, #tpu.memory_space<vmem>>, vector<4x4xf32>,
    %78 = vector.extract_strided_slice %75 {offsets = [4, 0], sizes = [4, 4], strides = [1, 1]} : vector<16x4xf32> to vector<4x4xf32>
    %c4_77 = arith.constant 4 : index
    %c4_78 = arith.constant 4 : index
    %79 = vector.load %arg4[%c4_77, %c4_78] : memref<16x16xf32, #tpu.memory_space<vmem>>, vector<4x4xf32>
    tpu.vector_store %arg4[%c4_77, %c4_78], %78 {strides = array<i32>} : memref<16x16xf32, #tpu.memory_space<vmem>>, vector<4x4xf32>,
    %80 = vector.extract_strided_slice %75 {offsets = [8, 0], sizes = [4, 4], strides = [1, 1]} : vector<16x4xf32> to vector<4x4xf32>
    %c4_79 = arith.constant 4 : index
    %c8_80 = arith.constant 8 : index
    %81 = vector.load %arg4[%c4_79, %c8_80] : memref<16x16xf32, #tpu.memory_space<vmem>>, vector<4x4xf32>
    tpu.vector_store %arg4[%c4_79, %c8_80], %80 {strides = array<i32>} : memref<16x16xf32, #tpu.memory_space<vmem>>, vector<4x4xf32>,
    %82 = vector.extract_strided_slice %75 {offsets = [12, 0], sizes = [4, 4], strides = [1, 1]} : vector<16x4xf32> to vector<4x4xf32>
    %c4_81 = arith.constant 4 : index
    %c12_82 = arith.constant 12 : index
    %83 = vector.load %arg4[%c4_81, %c12_82] : memref<16x16xf32, #tpu.memory_space<vmem>>, vector<4x4xf32>
    tpu.vector_store %arg4[%c4_81, %c12_82], %82 {strides = array<i32>} : memref<16x16xf32, #tpu.memory_space<vmem>>, vector<4x4xf32>,
    %c2_83 = arith.constant 2 : index
    %c0_84 = arith.constant 0 : index
    %84 = tpu.strided_load %arg3[%c2_83, %c0_84] {strides = array<i32: 4, 1>} : memref<16x16xf32, #tpu.memory_space<vmem>>, vector<4x16xf32>
    %85 = tpu.transpose %84, [1, 0] : vector<4x16xf32> -> vector<16x4xf32>
    %86 = vector.extract_strided_slice %85 {offsets = [0, 0], sizes = [4, 4], strides = [1, 1]} : vector<16x4xf32> to vector<4x4xf32>
    %c8_85 = arith.constant 8 : index
    %c0_86 = arith.constant 0 : index
    %87 = vector.load %arg4[%c8_85, %c0_86] : memref<16x16xf32, #tpu.memory_space<vmem>>, vector<4x4xf32>
    tpu.vector_store %arg4[%c8_85, %c0_86], %86 {strides = array<i32>} : memref<16x16xf32, #tpu.memory_space<vmem>>, vector<4x4xf32>,
    %88 = vector.extract_strided_slice %85 {offsets = [4, 0], sizes = [4, 4], strides = [1, 1]} : vector<16x4xf32> to vector<4x4xf32>
    %c8_87 = arith.constant 8 : index
    %c4_88 = arith.constant 4 : index
    %89 = vector.load %arg4[%c8_87, %c4_88] : memref<16x16xf32, #tpu.memory_space<vmem>>, vector<4x4xf32>
    tpu.vector_store %arg4[%c8_87, %c4_88], %88 {strides = array<i32>} : memref<16x16xf32, #tpu.memory_space<vmem>>, vector<4x4xf32>,
    %90 = vector.extract_strided_slice %85 {offsets = [8, 0], sizes = [4, 4], strides = [1, 1]} : vector<16x4xf32> to vector<4x4xf32>
    %c8_89 = arith.constant 8 : index
    %c8_90 = arith.constant 8 : index
    %91 = vector.load %arg4[%c8_89, %c8_90] : memref<16x16xf32, #tpu.memory_space<vmem>>, vector<4x4xf32>
    tpu.vector_store %arg4[%c8_89, %c8_90], %90 {strides = array<i32>} : memref<16x16xf32, #tpu.memory_space<vmem>>, vector<4x4xf32>,
    %92 = vector.extract_strided_slice %85 {offsets = [12, 0], sizes = [4, 4], strides = [1, 1]} : vector<16x4xf32> to vector<4x4xf32>
    %c8_91 = arith.constant 8 : index
    %c12_92 = arith.constant 12 : index
    %93 = vector.load %arg4[%c8_91, %c12_92] : memref<16x16xf32, #tpu.memory_space<vmem>>, vector<4x4xf32>
    tpu.vector_store %arg4[%c8_91, %c12_92], %92 {strides = array<i32>} : memref<16x16xf32, #tpu.memory_space<vmem>>, vector<4x4xf32>,
    %c3_93 = arith.constant 3 : index
    %c0_94 = arith.constant 0 : index
    %94 = tpu.strided_load %arg3[%c3_93, %c0_94] {strides = array<i32: 4, 1>} : memref<16x16xf32, #tpu.memory_space<vmem>>, vector<4x16xf32>
    %95 = tpu.transpose %94, [1, 0] : vector<4x16xf32> -> vector<16x4xf32>
    %96 = vector.extract_strided_slice %95 {offsets = [0, 0], sizes = [4, 4], strides = [1, 1]} : vector<16x4xf32> to vector<4x4xf32>
    %c12_95 = arith.constant 12 : index
    %c0_96 = arith.constant 0 : index
    %97 = vector.load %arg4[%c12_95, %c0_96] : memref<16x16xf32, #tpu.memory_space<vmem>>, vector<4x4xf32>
    tpu.vector_store %arg4[%c12_95, %c0_96], %96 {strides = array<i32>} : memref<16x16xf32, #tpu.memory_space<vmem>>, vector<4x4xf32>,
    %98 = vector.extract_strided_slice %95 {offsets = [4, 0], sizes = [4, 4], strides = [1, 1]} : vector<16x4xf32> to vector<4x4xf32>
    %c12_97 = arith.constant 12 : index
    %c4_98 = arith.constant 4 : index
    %99 = vector.load %arg4[%c12_97, %c4_98] : memref<16x16xf32, #tpu.memory_space<vmem>>, vector<4x4xf32>
    tpu.vector_store %arg4[%c12_97, %c4_98], %98 {strides = array<i32>} : memref<16x16xf32, #tpu.memory_space<vmem>>, vector<4x4xf32>,
    %100 = vector.extract_strided_slice %95 {offsets = [8, 0], sizes = [4, 4], strides = [1, 1]} : vector<16x4xf32> to vector<4x4xf32>
    %c12_99 = arith.constant 12 : index
    %c8_100 = arith.constant 8 : index
    %101 = vector.load %arg4[%c12_99, %c8_100] : memref<16x16xf32, #tpu.memory_space<vmem>>, vector<4x4xf32>
    tpu.vector_store %arg4[%c12_99, %c8_100], %100 {strides = array<i32>} : memref<16x16xf32, #tpu.memory_space<vmem>>, vector<4x4xf32>,
    %102 = vector.extract_strided_slice %95 {offsets = [12, 0], sizes = [4, 4], strides = [1, 1]} : vector<16x4xf32> to vector<4x4xf32>
    %c12_101 = arith.constant 12 : index
    %c12_102 = arith.constant 12 : index
    %103 = vector.load %arg4[%c12_101, %c12_102] : memref<16x16xf32, #tpu.memory_space<vmem>>, vector<4x4xf32>
    tpu.vector_store %arg4[%c12_101, %c12_102], %102 {strides = array<i32>} : memref<16x16xf32, #tpu.memory_space<vmem>>, vector<4x4xf32>,
    %c0_103 = arith.constant 0 : index
    %c0_104 = arith.constant 0 : index
    %104 = tpu.strided_load %arg4[%c0_103, %c0_104] {strides = array<i32: 4, 1>} : memref<16x16xf32, #tpu.memory_space<vmem>>, vector<4x16xf32>
    %c1_105 = arith.constant 1 : index
    %c0_106 = arith.constant 0 : index
    %c0_107 = arith.constant 0 : index
    %105 = vector.load %arg2[%c1_105, %c0_106, %c0_107] : memref<3x16x16xf32, #tpu.memory_space<vmem>>, vector<1x4x16xf32>
    %106 = vector.shape_cast %105 : vector<1x4x16xf32> to vector<4x16xf32>
    %107 = vector.shape_cast %104 : vector<4x16xf32> to vector<1x4x16xf32>
    tpu.vector_store %arg2[%c1_105, %c0_106, %c0_107], %107 {strides = array<i32>} : memref<3x16x16xf32, #tpu.memory_space<vmem>>, vector<1x4x16xf32>,
    %c1_108 = arith.constant 1 : index
    %c0_109 = arith.constant 0 : index
    %108 = tpu.strided_load %arg4[%c1_108, %c0_109] {strides = array<i32: 4, 1>} : memref<16x16xf32, #tpu.memory_space<vmem>>, vector<4x16xf32>
    %c1_110 = arith.constant 1 : index
    %c4_111 = arith.constant 4 : index
    %c0_112 = arith.constant 0 : index
    %109 = vector.load %arg2[%c1_110, %c4_111, %c0_112] : memref<3x16x16xf32, #tpu.memory_space<vmem>>, vector<1x4x16xf32>
    %110 = vector.shape_cast %109 : vector<1x4x16xf32> to vector<4x16xf32>
    %111 = vector.shape_cast %108 : vector<4x16xf32> to vector<1x4x16xf32>
    tpu.vector_store %arg2[%c1_110, %c4_111, %c0_112], %111 {strides = array<i32>} : memref<3x16x16xf32, #tpu.memory_space<vmem>>, vector<1x4x16xf32>,
    %c2_113 = arith.constant 2 : index
    %c0_114 = arith.constant 0 : index
    %112 = tpu.strided_load %arg4[%c2_113, %c0_114] {strides = array<i32: 4, 1>} : memref<16x16xf32, #tpu.memory_space<vmem>>, vector<4x16xf32>
    %c1_115 = arith.constant 1 : index
    %c8_116 = arith.constant 8 : index
    %c0_117 = arith.constant 0 : index
    %113 = vector.load %arg2[%c1_115, %c8_116, %c0_117] : memref<3x16x16xf32, #tpu.memory_space<vmem>>, vector<1x4x16xf32>
    %114 = vector.shape_cast %113 : vector<1x4x16xf32> to vector<4x16xf32>
    %115 = vector.shape_cast %112 : vector<4x16xf32> to vector<1x4x16xf32>
    tpu.vector_store %arg2[%c1_115, %c8_116, %c0_117], %115 {strides = array<i32>} : memref<3x16x16xf32, #tpu.memory_space<vmem>>, vector<1x4x16xf32>,
    %c3_118 = arith.constant 3 : index
    %c0_119 = arith.constant 0 : index
    %116 = tpu.strided_load %arg4[%c3_118, %c0_119] {strides = array<i32: 4, 1>} : memref<16x16xf32, #tpu.memory_space<vmem>>, vector<4x16xf32>
    %c1_120 = arith.constant 1 : index
    %c12_121 = arith.constant 12 : index
    %c0_122 = arith.constant 0 : index
    %117 = vector.load %arg2[%c1_120, %c12_121, %c0_122] : memref<3x16x16xf32, #tpu.memory_space<vmem>>, vector<1x4x16xf32>
    %118 = vector.shape_cast %117 : vector<1x4x16xf32> to vector<4x16xf32>
    %119 = vector.shape_cast %116 : vector<4x16xf32> to vector<1x4x16xf32>
    tpu.vector_store %arg2[%c1_120, %c12_121, %c0_122], %119 {strides = array<i32>} : memref<3x16x16xf32, #tpu.memory_space<vmem>>, vector<1x4x16xf32>,
    %c2_123 = arith.constant 2 : index
    %c0_124 = arith.constant 0 : index
    %c0_125 = arith.constant 0 : index
    %120 = vector.load %arg1[%c2_123, %c0_124, %c0_125] : memref<3x16x16xf32, #tpu.memory_space<vmem>>, vector<1x16x16xf32>
    %121 = vector.shape_cast %120 : vector<1x16x16xf32> to vector<16x16xf32>
    %122 = tpu.transpose %121, [1, 0] : vector<16x16xf32> -> vector<16x16xf32>
    %c0_126 = arith.constant 0 : index
    %c0_127 = arith.constant 0 : index
    %123 = vector.load %arg3[%c0_126, %c0_127] : memref<16x16xf32, #tpu.memory_space<vmem>>, vector<16x16xf32>
    tpu.vector_store %arg3[%c0_126, %c0_127], %122 {strides = array<i32>} : memref<16x16xf32, #tpu.memory_space<vmem>>, vector<16x16xf32>,
    %c0_128 = arith.constant 0 : index
    %c0_129 = arith.constant 0 : index
    %124 = tpu.strided_load %arg3[%c0_128, %c0_129] {strides = array<i32: 4, 1>} : memref<16x16xf32, #tpu.memory_space<vmem>>, vector<4x16xf32>
    %125 = tpu.transpose %124, [1, 0] : vector<4x16xf32> -> vector<16x4xf32>
    %126 = vector.extract_strided_slice %125 {offsets = [0, 0], sizes = [4, 4], strides = [1, 1]} : vector<16x4xf32> to vector<4x4xf32>
    %c0_130 = arith.constant 0 : index
    %c0_131 = arith.constant 0 : index
    %127 = vector.load %arg4[%c0_130, %c0_131] : memref<16x16xf32, #tpu.memory_space<vmem>>, vector<4x4xf32>
    tpu.vector_store %arg4[%c0_130, %c0_131], %126 {strides = array<i32>} : memref<16x16xf32, #tpu.memory_space<vmem>>, vector<4x4xf32>,
    %128 = vector.extract_strided_slice %125 {offsets = [4, 0], sizes = [4, 4], strides = [1, 1]} : vector<16x4xf32> to vector<4x4xf32>
    %c0_132 = arith.constant 0 : index
    %c4_133 = arith.constant 4 : index
    %129 = vector.load %arg4[%c0_132, %c4_133] : memref<16x16xf32, #tpu.memory_space<vmem>>, vector<4x4xf32>
    tpu.vector_store %arg4[%c0_132, %c4_133], %128 {strides = array<i32>} : memref<16x16xf32, #tpu.memory_space<vmem>>, vector<4x4xf32>,
    %130 = vector.extract_strided_slice %125 {offsets = [8, 0], sizes = [4, 4], strides = [1, 1]} : vector<16x4xf32> to vector<4x4xf32>
    %c0_134 = arith.constant 0 : index
    %c8_135 = arith.constant 8 : index
    %131 = vector.load %arg4[%c0_134, %c8_135] : memref<16x16xf32, #tpu.memory_space<vmem>>, vector<4x4xf32>
    tpu.vector_store %arg4[%c0_134, %c8_135], %130 {strides = array<i32>} : memref<16x16xf32, #tpu.memory_space<vmem>>, vector<4x4xf32>,
    %132 = vector.extract_strided_slice %125 {offsets = [12, 0], sizes = [4, 4], strides = [1, 1]} : vector<16x4xf32> to vector<4x4xf32>
    %c0_136 = arith.constant 0 : index
    %c12_137 = arith.constant 12 : index
    %133 = vector.load %arg4[%c0_136, %c12_137] : memref<16x16xf32, #tpu.memory_space<vmem>>, vector<4x4xf32>
    tpu.vector_store %arg4[%c0_136, %c12_137], %132 {strides = array<i32>} : memref<16x16xf32, #tpu.memory_space<vmem>>, vector<4x4xf32>,
    %c1_138 = arith.constant 1 : index
    %c0_139 = arith.constant 0 : index
    %134 = tpu.strided_load %arg3[%c1_138, %c0_139] {strides = array<i32: 4, 1>} : memref<16x16xf32, #tpu.memory_space<vmem>>, vector<4x16xf32>
    %135 = tpu.transpose %134, [1, 0] : vector<4x16xf32> -> vector<16x4xf32>
    %136 = vector.extract_strided_slice %135 {offsets = [0, 0], sizes = [4, 4], strides = [1, 1]} : vector<16x4xf32> to vector<4x4xf32>
    %c4_140 = arith.constant 4 : index
    %c0_141 = arith.constant 0 : index
    %137 = vector.load %arg4[%c4_140, %c0_141] : memref<16x16xf32, #tpu.memory_space<vmem>>, vector<4x4xf32>
    tpu.vector_store %arg4[%c4_140, %c0_141], %136 {strides = array<i32>} : memref<16x16xf32, #tpu.memory_space<vmem>>, vector<4x4xf32>,
    %138 = vector.extract_strided_slice %135 {offsets = [4, 0], sizes = [4, 4], strides = [1, 1]} : vector<16x4xf32> to vector<4x4xf32>
    %c4_142 = arith.constant 4 : index
    %c4_143 = arith.constant 4 : index
    %139 = vector.load %arg4[%c4_142, %c4_143] : memref<16x16xf32, #tpu.memory_space<vmem>>, vector<4x4xf32>
    tpu.vector_store %arg4[%c4_142, %c4_143], %138 {strides = array<i32>} : memref<16x16xf32, #tpu.memory_space<vmem>>, vector<4x4xf32>,
    %140 = vector.extract_strided_slice %135 {offsets = [8, 0], sizes = [4, 4], strides = [1, 1]} : vector<16x4xf32> to vector<4x4xf32>
    %c4_144 = arith.constant 4 : index
    %c8_145 = arith.constant 8 : index
    %141 = vector.load %arg4[%c4_144, %c8_145] : memref<16x16xf32, #tpu.memory_space<vmem>>, vector<4x4xf32>
    tpu.vector_store %arg4[%c4_144, %c8_145], %140 {strides = array<i32>} : memref<16x16xf32, #tpu.memory_space<vmem>>, vector<4x4xf32>,
    %142 = vector.extract_strided_slice %135 {offsets = [12, 0], sizes = [4, 4], strides = [1, 1]} : vector<16x4xf32> to vector<4x4xf32>
    %c4_146 = arith.constant 4 : index
    %c12_147 = arith.constant 12 : index
    %143 = vector.load %arg4[%c4_146, %c12_147] : memref<16x16xf32, #tpu.memory_space<vmem>>, vector<4x4xf32>
    tpu.vector_store %arg4[%c4_146, %c12_147], %142 {strides = array<i32>} : memref<16x16xf32, #tpu.memory_space<vmem>>, vector<4x4xf32>,
    %c2_148 = arith.constant 2 : index
    %c0_149 = arith.constant 0 : index
    %144 = tpu.strided_load %arg3[%c2_148, %c0_149] {strides = array<i32: 4, 1>} : memref<16x16xf32, #tpu.memory_space<vmem>>, vector<4x16xf32>
    %145 = tpu.transpose %144, [1, 0] : vector<4x16xf32> -> vector<16x4xf32>
    %146 = vector.extract_strided_slice %145 {offsets = [0, 0], sizes = [4, 4], strides = [1, 1]} : vector<16x4xf32> to vector<4x4xf32>
    %c8_150 = arith.constant 8 : index
    %c0_151 = arith.constant 0 : index
    %147 = vector.load %arg4[%c8_150, %c0_151] : memref<16x16xf32, #tpu.memory_space<vmem>>, vector<4x4xf32>
    tpu.vector_store %arg4[%c8_150, %c0_151], %146 {strides = array<i32>} : memref<16x16xf32, #tpu.memory_space<vmem>>, vector<4x4xf32>,
    %148 = vector.extract_strided_slice %145 {offsets = [4, 0], sizes = [4, 4], strides = [1, 1]} : vector<16x4xf32> to vector<4x4xf32>
    %c8_152 = arith.constant 8 : index
    %c4_153 = arith.constant 4 : index
    %149 = vector.load %arg4[%c8_152, %c4_153] : memref<16x16xf32, #tpu.memory_space<vmem>>, vector<4x4xf32>
    tpu.vector_store %arg4[%c8_152, %c4_153], %148 {strides = array<i32>} : memref<16x16xf32, #tpu.memory_space<vmem>>, vector<4x4xf32>,
    %150 = vector.extract_strided_slice %145 {offsets = [8, 0], sizes = [4, 4], strides = [1, 1]} : vector<16x4xf32> to vector<4x4xf32>
    %c8_154 = arith.constant 8 : index
    %c8_155 = arith.constant 8 : index
    %151 = vector.load %arg4[%c8_154, %c8_155] : memref<16x16xf32, #tpu.memory_space<vmem>>, vector<4x4xf32>
    tpu.vector_store %arg4[%c8_154, %c8_155], %150 {strides = array<i32>} : memref<16x16xf32, #tpu.memory_space<vmem>>, vector<4x4xf32>,
    %152 = vector.extract_strided_slice %145 {offsets = [12, 0], sizes = [4, 4], strides = [1, 1]} : vector<16x4xf32> to vector<4x4xf32>
    %c8_156 = arith.constant 8 : index
    %c12_157 = arith.constant 12 : index
    %153 = vector.load %arg4[%c8_156, %c12_157] : memref<16x16xf32, #tpu.memory_space<vmem>>, vector<4x4xf32>
    tpu.vector_store %arg4[%c8_156, %c12_157], %152 {strides = array<i32>} : memref<16x16xf32, #tpu.memory_space<vmem>>, vector<4x4xf32>,
    %c3_158 = arith.constant 3 : index
    %c0_159 = arith.constant 0 : index
    %154 = tpu.strided_load %arg3[%c3_158, %c0_159] {strides = array<i32: 4, 1>} : memref<16x16xf32, #tpu.memory_space<vmem>>, vector<4x16xf32>
    %155 = tpu.transpose %154, [1, 0] : vector<4x16xf32> -> vector<16x4xf32>
    %156 = vector.extract_strided_slice %155 {offsets = [0, 0], sizes = [4, 4], strides = [1, 1]} : vector<16x4xf32> to vector<4x4xf32>
    %c12_160 = arith.constant 12 : index
    %c0_161 = arith.constant 0 : index
    %157 = vector.load %arg4[%c12_160, %c0_161] : memref<16x16xf32, #tpu.memory_space<vmem>>, vector<4x4xf32>
    tpu.vector_store %arg4[%c12_160, %c0_161], %156 {strides = array<i32>} : memref<16x16xf32, #tpu.memory_space<vmem>>, vector<4x4xf32>,
    %158 = vector.extract_strided_slice %155 {offsets = [4, 0], sizes = [4, 4], strides = [1, 1]} : vector<16x4xf32> to vector<4x4xf32>
    %c12_162 = arith.constant 12 : index
    %c4_163 = arith.constant 4 : index
    %159 = vector.load %arg4[%c12_162, %c4_163] : memref<16x16xf32, #tpu.memory_space<vmem>>, vector<4x4xf32>
    tpu.vector_store %arg4[%c12_162, %c4_163], %158 {strides = array<i32>} : memref<16x16xf32, #tpu.memory_space<vmem>>, vector<4x4xf32>,
    %160 = vector.extract_strided_slice %155 {offsets = [8, 0], sizes = [4, 4], strides = [1, 1]} : vector<16x4xf32> to vector<4x4xf32>
    %c12_164 = arith.constant 12 : index
    %c8_165 = arith.constant 8 : index
    %161 = vector.load %arg4[%c12_164, %c8_165] : memref<16x16xf32, #tpu.memory_space<vmem>>, vector<4x4xf32>
    tpu.vector_store %arg4[%c12_164, %c8_165], %160 {strides = array<i32>} : memref<16x16xf32, #tpu.memory_space<vmem>>, vector<4x4xf32>,
    %162 = vector.extract_strided_slice %155 {offsets = [12, 0], sizes = [4, 4], strides = [1, 1]} : vector<16x4xf32> to vector<4x4xf32>
    %c12_166 = arith.constant 12 : index
    %c12_167 = arith.constant 12 : index
    %163 = vector.load %arg4[%c12_166, %c12_167] : memref<16x16xf32, #tpu.memory_space<vmem>>, vector<4x4xf32>
    tpu.vector_store %arg4[%c12_166, %c12_167], %162 {strides = array<i32>} : memref<16x16xf32, #tpu.memory_space<vmem>>, vector<4x4xf32>,
    %c0_168 = arith.constant 0 : index
    %c0_169 = arith.constant 0 : index
    %164 = tpu.strided_load %arg4[%c0_168, %c0_169] {strides = array<i32: 4, 1>} : memref<16x16xf32, #tpu.memory_space<vmem>>, vector<4x16xf32>
    %c2_170 = arith.constant 2 : index
    %c0_171 = arith.constant 0 : index
    %c0_172 = arith.constant 0 : index
    %165 = vector.load %arg2[%c2_170, %c0_171, %c0_172] : memref<3x16x16xf32, #tpu.memory_space<vmem>>, vector<1x4x16xf32>
    %166 = vector.shape_cast %165 : vector<1x4x16xf32> to vector<4x16xf32>
    %167 = vector.shape_cast %164 : vector<4x16xf32> to vector<1x4x16xf32>
    tpu.vector_store %arg2[%c2_170, %c0_171, %c0_172], %167 {strides = array<i32>} : memref<3x16x16xf32, #tpu.memory_space<vmem>>, vector<1x4x16xf32>,
    %c1_173 = arith.constant 1 : index
    %c0_174 = arith.constant 0 : index
    %168 = tpu.strided_load %arg4[%c1_173, %c0_174] {strides = array<i32: 4, 1>} : memref<16x16xf32, #tpu.memory_space<vmem>>, vector<4x16xf32>
    %c2_175 = arith.constant 2 : index
    %c4_176 = arith.constant 4 : index
    %c0_177 = arith.constant 0 : index
    %169 = vector.load %arg2[%c2_175, %c4_176, %c0_177] : memref<3x16x16xf32, #tpu.memory_space<vmem>>, vector<1x4x16xf32>
    %170 = vector.shape_cast %169 : vector<1x4x16xf32> to vector<4x16xf32>
    %171 = vector.shape_cast %168 : vector<4x16xf32> to vector<1x4x16xf32>
    tpu.vector_store %arg2[%c2_175, %c4_176, %c0_177], %171 {strides = array<i32>} : memref<3x16x16xf32, #tpu.memory_space<vmem>>, vector<1x4x16xf32>,
    %c2_178 = arith.constant 2 : index
    %c0_179 = arith.constant 0 : index
    %172 = tpu.strided_load %arg4[%c2_178, %c0_179] {strides = array<i32: 4, 1>} : memref<16x16xf32, #tpu.memory_space<vmem>>, vector<4x16xf32>
    %c2_180 = arith.constant 2 : index
    %c8_181 = arith.constant 8 : index
    %c0_182 = arith.constant 0 : index
    %173 = vector.load %arg2[%c2_180, %c8_181, %c0_182] : memref<3x16x16xf32, #tpu.memory_space<vmem>>, vector<1x4x16xf32>
    %174 = vector.shape_cast %173 : vector<1x4x16xf32> to vector<4x16xf32>
    %175 = vector.shape_cast %172 : vector<4x16xf32> to vector<1x4x16xf32>
    tpu.vector_store %arg2[%c2_180, %c8_181, %c0_182], %175 {strides = array<i32>} : memref<3x16x16xf32, #tpu.memory_space<vmem>>, vector<1x4x16xf32>,
    %c3_183 = arith.constant 3 : index
    %c0_184 = arith.constant 0 : index
    %176 = tpu.strided_load %arg4[%c3_183, %c0_184] {strides = array<i32: 4, 1>} : memref<16x16xf32, #tpu.memory_space<vmem>>, vector<4x16xf32>
    %c2_185 = arith.constant 2 : index
    %c12_186 = arith.constant 12 : index
    %c0_187 = arith.constant 0 : index
    %177 = vector.load %arg2[%c2_185, %c12_186, %c0_187] : memref<3x16x16xf32, #tpu.memory_space<vmem>>, vector<1x4x16xf32>
    %178 = vector.shape_cast %177 : vector<1x4x16xf32> to vector<4x16xf32>
    %179 = vector.shape_cast %176 : vector<4x16xf32> to vector<1x4x16xf32>
    tpu.vector_store %arg2[%c2_185, %c12_186, %c0_187], %179 {strides = array<i32>} : memref<3x16x16xf32, #tpu.memory_space<vmem>>, vector<1x4x16xf32>,
    return
  }
  func.func @transform_0(%arg0: i32) -> (i32, i32, i32) {
    %c0_i32 = arith.constant 0 : i32
    %c0_i32_0 = arith.constant 0 : i32
    %c0_i32_1 = arith.constant 0 : i32
    return %arg0, %c0_i32, %c0_i32_0 : i32, i32, i32
  }
  func.func @transform_1(%arg0: i32) -> (i32, i32, i32) {
    %c0_i32 = arith.constant 0 : i32
    %c0_i32_0 = arith.constant 0 : i32
    %c0_i32_1 = arith.constant 0 : i32
    return %arg0, %c0_i32, %c0_i32_0 : i32, i32, i32
  }
}

</mosaic_0001>

<llo_original>
// kernel: tpu_custom_call.1
$region0: #{tpu_custom_call.1}
  #allocation0 [shape = 'u32[]', space=smem, size = 0x4, offset = 0x4, fixed_abs, tag = 'smem constant byte address 0x4 - core index']
  #allocation1 [shape = 'u32[144,128]{1,0:T(1,128)}', space=vmem, size = 0x12000, scoped, tag = 'internal scratch']
  #allocation2 [shape = 'f32[16,16]{1,0:T(8,128)}', space=vmem, size = 0x2000, scoped, tag = 'scratch operand']
  #allocation3 [shape = 'f32[16,16]{1,0:T(8,128)}', space=vmem, size = 0x2000, scoped, tag = 'scratch operand']
  %s0 = inlined_call_operand.hbm [shape: f32[6,16,16], index: 0, kind: input, shape index: {}]
  %s1 = inlined_call_operand.hbm [shape: f32[6,16,16], index: 1, kind: output, shape index: {}]
  %s2 = sld [smem:[#allocation0]]
  $region41: #{tpu_custom_call.1} parent=0
    _
  %s4 = ssub.s32 1, %s2
  %s5 = scalar_select 0, %s4, %s2
  $region1: #{tpu_custom_call.1} parent=0
    #allocation4 [shape = 'u8[49152]{0}', space=vmem, size = 0xc000, scoped, tag = 'input window, operand 0']
    #allocation5 [shape = 's32[2]{0}', space=sflag, size = 0x8, scoped, tag = 'scoped memory for tpu_custom_call.1']
    #allocation6 [shape = 's32[2]{0}', space=sflag, size = 0x8, scoped, tag = 'scoped memory for tpu_custom_call.1']
    #allocation7 [shape = 'u8[49152]{0}', space=vmem, size = 0xc000, scoped, tag = 'output window, operand 0']
    %6 = vsyncpa [#allocation5], 0
    %s7 = scalar_lea.sflag [#allocation5], 1
    %8 = vsyncpa %s7, 0
    %9 = vsyncpa [#allocation6], 0
    %s10 = scalar_lea.sflag [#allocation6], 1
    %11 = vsyncpa %s10, 0
    loop: start=0, step=1, limit=4
    $region2: #{tpu_custom_call.1} parent=1 // loop_pre_header
      _
    $region3: #{tpu_custom_call.1} parent=1 // loop_header
      %s13 = sphi 0, %s17
      %p14 = scmp.ge.s32.totalorder %s13, 4
      %s23 = sphi 0, %s25
      %s26 = sphi 0, %s23
      %s27 = sphi 0, %s26
      %s43 = sphi 0, %s27
      %s49 = sphi 0, %s51
      %s52 = sphi 0, %s49
      %s53 = sphi 0, %s52
      %s69 = sphi 0, %s53
    $region4: #{tpu_custom_call.1} parent=1 // loop_header_branch
      %16 = sbr.rel (%p14) target = $region8
    $region5: #{tpu_custom_call.1} parent=1 // loop_body
      %s18 = ssub.s32 %s13, 1
      %s19 = ssub.s32 %s13, 2
      %s20 = sadd.s32 %s13, 1
      %s21 = ssub.s32 %s13, %s20
      %p22 = scmp.eq.s32.totalorder %s21, 0
      %s24 = sadd.s32 %s23, 1
      %s25 = scalar_select %p22, %s23, %s24
      %p28 = pneg %p22
      %p29 = scmp.eq.s32.totalorder %s13, 1
      %p30 = por %p28, %p29
      %p31 = scmp.ne.s32.totalorder %s23, %s26
      %p32 = scmp.eq.s32.totalorder %s13, 0
      %p33 = por %p31, %p32
      %p34 = scmp.ne.s32.totalorder %s23, %s26
      %p35 = scmp.eq.s32.totalorder %s18, 1
      %p36 = por %p34, %p35
      %p37 = scmp.ne.s32.totalorder %s26, %s27
      %p38 = scmp.eq.s32.totalorder %s18, 0
      %p39 = por %p37, %p38
      %p40 = scmp.ne.s32.totalorder %s26, %s27
      %p41 = scmp.eq.s32.totalorder %s19, 1
      %p42 = por %p40, %p41
      %p44 = scmp.ne.s32.totalorder %s27, %s43
      %p45 = scmp.eq.s32.totalorder %s19, 0
      %p46 = por %p44, %p45
      %s47 = ssub.s32 %s13, %s20
      %p48 = scmp.eq.s32.totalorder %s47, 0
      %s50 = sadd.s32 %s49, 1
      %s51 = scalar_select %p48, %s49, %s50
      %p54 = pneg %p48
      %p55 = scmp.eq.s32.totalorder %s13, 1
      %p56 = por %p54, %p55
      %p57 = scmp.ne.s32.totalorder %s49, %s52
      %p58 = scmp.eq.s32.totalorder %s13, 0
      %p59 = por %p57, %p58
      %p60 = scmp.ne.s32.totalorder %s49, %s52
      %p61 = scmp.eq.s32.totalorder %s18, 1
      %p62 = por %p60, %p61
      %p63 = scmp.ne.s32.totalorder %s52, %s53
      %p64 = scmp.eq.s32.totalorder %s18, 0
      %p65 = por %p63, %p64
      %p66 = scmp.ne.s32.totalorder %s52, %s53
      %p67 = scmp.eq.s32.totalorder %s19, 1
      %p68 = por %p66, %p67
      %p70 = scmp.ne.s32.totalorder %s53, %s69
      %p71 = scmp.eq.s32.totalorder %s19, 0
      %p72 = por %p70, %p71
      %p73 = scmp.le.s32.totalorder 1, %s13
      %p74 = scmp.lt.s32.totalorder %s13, 3
      %p75 = pnand %p73, %p74
      %p76 = pneg %p75
      // Predicated region
      $region9: #{tpu_custom_call.1} parent=5 // pred_check
        _
      $region10: #{tpu_custom_call.1} parent=5 // pred_check_branch
        %78 = sbr.rel (%p75) target = $region12
      $region11: #{tpu_custom_call.1} parent=5 // pred_region
        %s79 = ssub.s32 %s13, 1
      $region12: #{tpu_custom_call.1} parent=5 // pred_fallthru
        _
      %p80 = scmp.lt.s32.totalorder %s13, 2
      // Predicated region
      $region13: #{tpu_custom_call.1} parent=5 // pred_check
        %p81 = pneg %p80
      $region14: #{tpu_custom_call.1} parent=5 // pred_check_branch
        %83 = sbr.rel (%p81) target = $region16
      $region15: #{tpu_custom_call.1} parent=5 // pred_region
        // Predicated region
        $region17: #{tpu_custom_call.1} parent=15 // pred_check
          %p84 = pneg %p33
        $region18: #{tpu_custom_call.1} parent=15 // pred_check_branch
          %86 = sbr.rel (%p84) target = $region20
        $region19: #{tpu_custom_call.1} parent=15 // pred_region
          %s87 = sand.u32 %s23, 1
          %s88 = scalar_lea.sflag [#allocation5], %s87
          %s89 = sand.u32 %s23, 1
          %s90 = smul.addr %s89, 48
          %s91 = scalar_lea.vmem [#allocation4], %s90
          %s92 = smul.u32 3, %s13
          %s94 = ssub.s32 768, 768
          %95 = vsyncadd %s88, %s94
          %s96 = smul.addr %s92, 2
          %s97 = smul.addr %s96, 128
          %s98 = scalar_lea.hbm %s0, %s97
          %s99 = sshll.u32 %s91, 4
          %s100 = int_to_ptr.vmem [resolvable:$true] %s99
          %105 = dma.hbm_to_vmem [thread:$0]  %s98, 768, %s100, %s88, 128, 128, 8
        $region20: #{tpu_custom_call.1} parent=15 // pred_fallthru
          _
      $region16: #{tpu_custom_call.1} parent=5 // pred_fallthru
        _
      %p106 = scmp.le.s32.totalorder 1, %s13
      %p107 = scmp.lt.s32.totalorder %s13, 3
      %p108 = pnand %p106, %p107
      %p109 = pneg %p108
      // Predicated region
      $region21: #{tpu_custom_call.1} parent=5 // pred_check
        _
      $region22: #{tpu_custom_call.1} parent=5 // pred_check_branch
        %111 = sbr.rel (%p108) target = $region24
      $region23: #{tpu_custom_call.1} parent=5 // pred_region
        %s112 = ssub.s32 %s13, 1
        %s113 = sand.u32 %s26, 1
        %s114 = scalar_lea.sflag [#allocation5], %s113
        %s115 = sand.u32 %s26, 1
        %s116 = smul.addr %s115, 48
        %s117 = scalar_lea.vmem [#allocation4], %s116
        // Predicated region
        $region25: #{tpu_custom_call.1} parent=23 // pred_check
          %p118 = pneg %p39
        $region26: #{tpu_custom_call.1} parent=23 // pred_check_branch
          %120 = sbr.rel (%p118) target = $region28
        $region27: #{tpu_custom_call.1} parent=23 // pred_region
          %121 = dma.done %s114, 768
        $region28: #{tpu_custom_call.1} parent=23 // pred_fallthru
          _
        %s122 = sand.u32 %s26, 1
        %s123 = scalar_lea.sflag [#allocation5], %s122
        %s124 = sand.u32 %s26, 1
        %s125 = smul.addr %s124, 48
        %s126 = scalar_lea.vmem [#allocation4], %s125
        %p127 = pneg %p39
        %p128 = pneg %p36
        %p129 = pneg %p65
        %p130 = pneg %p62
        %s131 = sand.u32 %s52, 1
        %s132 = scalar_lea.sflag [#allocation6], %s131
        %s133 = sand.u32 %s52, 1
        %s134 = smul.addr %s133, 48
        %s135 = scalar_lea.vmem [#allocation7], %s134
        %s136 = smul.u32 3, %s18
        %s137 = smul.u32 3, %s18
        %v138 = vld [vmem:[%s117] sm:$0xff]
        %v139 = vld [vmem:[%s117 + $0x8] sm:$0xff]
        %140 = vxpose.xlu0.b32.start [1/16] %v138, 128
        %141 = vxpose.xlu0.b32.cont [2/16] %v139, 128
        %142 = vxpose.xlu0.b32.cont [3/16] 0.0, 128
        %143 = vxpose.xlu0.b32.cont [4/16] 0.0, 128
        %144 = vxpose.xlu0.b32.cont [5/16] 0.0, 128
        %145 = vxpose.xlu0.b32.cont [6/16] 0.0, 128
        %146 = vxpose.xlu0.b32.cont [7/16] 0.0, 128
        %147 = vxpose.xlu0.b32.cont [8/16] 0.0, 128
        %148 = vxpose.xlu0.b32.cont [9/16] 0.0, 128
        %149 = vxpose.xlu0.b32.cont [10/16] 0.0, 128
        %150 = vxpose.xlu0.b32.cont [11/16] 0.0, 128
        %151 = vxpose.xlu0.b32.cont [12/16] 0.0, 128
        %152 = vxpose.xlu0.b32.cont [13/16] 0.0, 128
        %153 = vxpose.xlu0.b32.cont [14/16] 0.0, 128
        %154 = vxpose.xlu0.b32.cont [15/16] 0.0, 128
        %155 = vxpose.xlu0.b32.end [16/16] 0.0, 128
        %v156 = vpop.trf.xlu0
        %v157 = vpop.trf.xlu0
        %v158 = vpop.trf.xlu0
        %v159 = vpop.trf.xlu0
        %v160 = vpop.trf.xlu0
        %v161 = vpop.trf.xlu0
        %v162 = vpop.trf.xlu0
        %v163 = vpop.trf.xlu0
        %v164 = vpop.trf.xlu0
        %v165 = vpop.trf.xlu0
        %v166 = vpop.trf.xlu0
        %v167 = vpop.trf.xlu0
        %v168 = vpop.trf.xlu0
        %v169 = vpop.trf.xlu0
        %v170 = vpop.trf.xlu0
        %v171 = vpop.trf.xlu0
        %vm172 = vcmask 130048
        %173 = vst.msk [vmem:[#allocation2] sm:$0xff] %vm172, %v156
        %174 = vst.msk [vmem:[#allocation2 + $0x8] sm:$0xff] %vm172, %v157
        %v175 = vld [vmem:[#allocation2] ss:$4 sm:$0xf]
        %176 = vxpose.xlu0.b32.start [1/16] %v175, 128
        %177 = vxpose.xlu0.b32.cont [2/16] 0.0, 128
        %178 = vxpose.xlu0.b32.cont [3/16] 0.0, 128
        %179 = vxpose.xlu0.b32.cont [4/16] 0.0, 128
        %180 = vxpose.xlu0.b32.cont [5/16] 0.0, 128
        %181 = vxpose.xlu0.b32.cont [6/16] 0.0, 128
        %182 = vxpose.xlu0.b32.cont [7/16] 0.0, 128
        %183 = vxpose.xlu0.b32.cont [8/16] 0.0, 128
        %184 = vxpose.xlu0.b32.cont [9/16] 0.0, 128
        %185 = vxpose.xlu0.b32.cont [10/16] 0.0, 128
        %186 = vxpose.xlu0.b32.cont [11/16] 0.0, 128
        %187 = vxpose.xlu0.b32.cont [12/16] 0.0, 128
        %188 = vxpose.xlu0.b32.cont [13/16] 0.0, 128
        %189 = vxpose.xlu0.b32.cont [14/16] 0.0, 128
        %190 = vxpose.xlu0.b32.cont [15/16] 0.0, 128
        %191 = vxpose.xlu0.b32.end [16/16] 0.0, 128
        %v192 = vpop.trf.xlu0
        %v193 = vpop.trf.xlu0
        %v194 = vpop.trf.xlu0
        %v195 = vpop.trf.xlu0
        %v196 = vpop.trf.xlu0
        %v197 = vpop.trf.xlu0
        %v198 = vpop.trf.xlu0
        %v199 = vpop.trf.xlu0
        %v200 = vpop.trf.xlu0
        %v201 = vpop.trf.xlu0
        %v202 = vpop.trf.xlu0
        %v203 = vpop.trf.xlu0
        %v204 = vpop.trf.xlu0
        %v205 = vpop.trf.xlu0
        %v206 = vpop.trf.xlu0
        %v207 = vpop.trf.xlu0
        %vm208 = vcmask 27648
        %209 = vst.msk [vmem:[#allocation3] sm:$0xf] %vm208, %v192
        %211 = vrot.lane.b32.xlu0 %v192, 4
        %v212 = vpop.permute.xlu0 %211
        %vm214 = vcmask 64548
        %215 = vst.msk [vmem:[#allocation3 - $0x4] sm:$0xf0] %vm214, %v212
        %217 = vrot.lane.b32.xlu0 %v193, 8
        %v218 = vpop.permute.xlu0 %217
        %vm220 = vcmask 93248
        %221 = vst.msk [vmem:[#allocation3] sm:$0xf] %vm220, %v218
        %222 = vrot.lane.b32.xlu0 %v193, 12
        %v223 = vpop.permute.xlu0 %222
        %vm225 = vcmask 130148
        %226 = vst.msk [vmem:[#allocation3 - $0x4] sm:$0xf0] %vm225, %v223
        %s227 = scalar_lea.vmem [#allocation2], 1
        %v228 = vld [vmem:[%s227] ss:$4 sm:$0xf]
        %229 = vxpose.xlu0.b32.start [1/16] %v228, 128
        %230 = vxpose.xlu0.b32.cont [2/16] 0.0, 128
        %231 = vxpose.xlu0.b32.cont [3/16] 0.0, 128
        %232 = vxpose.xlu0.b32.cont [4/16] 0.0, 128
        %233 = vxpose.xlu0.b32.cont [5/16] 0.0, 128
        %234 = vxpose.xlu0.b32.cont [6/16] 0.0, 128
        %235 = vxpose.xlu0.b32.cont [7/16] 0.0, 128
        %236 = vxpose.xlu0.b32.cont [8/16] 0.0, 128
        %237 = vxpose.xlu0.b32.cont [9/16] 0.0, 128
        %238 = vxpose.xlu0.b32.cont [10/16] 0.0, 128
        %239 = vxpose.xlu0.b32.cont [11/16] 0.0, 128
        %240 = vxpose.xlu0.b32.cont [12/16] 0.0, 128
        %241 = vxpose.xlu0.b32.cont [13/16] 0.0, 128
        %242 = vxpose.xlu0.b32.cont [14/16] 0.0, 128
        %243 = vxpose.xlu0.b32.cont [15/16] 0.0, 128
        %244 = vxpose.xlu0.b32.end [16/16] 0.0, 128
        %v245 = vpop.trf.xlu0
        %v246 = vpop.trf.xlu0
        %v247 = vpop.trf.xlu0
        %v248 = vpop.trf.xlu0
        %v249 = vpop.trf.xlu0
        %v250 = vpop.trf.xlu0
        %v251 = vpop.trf.xlu0
        %v252 = vpop.trf.xlu0
        %v253 = vpop.trf.xlu0
        %v254 = vpop.trf.xlu0
        %v255 = vpop.trf.xlu0
        %v256 = vpop.trf.xlu0
        %v257 = vpop.trf.xlu0
        %v258 = vpop.trf.xlu0
        %v259 = vpop.trf.xlu0
        %v260 = vpop.trf.xlu0
        %261 = vst.msk [vmem:[#allocation3 + $0x4] sm:$0xf] %vm208, %v245
        %263 = vrot.lane.b32.xlu0 %v245, 4
        %v264 = vpop.permute.xlu0 %263
        %266 = vst.msk [vmem:[#allocation3] sm:$0xf0] %vm214, %v264
        %268 = vrot.lane.b32.xlu0 %v246, 8
        %v269 = vpop.permute.xlu0 %268
        %271 = vst.msk [vmem:[#allocation3 + $0x4] sm:$0xf] %vm220, %v269
        %272 = vrot.lane.b32.xlu0 %v246, 12
        %v273 = vpop.permute.xlu0 %272
        %275 = vst.msk [vmem:[#allocation3] sm:$0xf0] %vm225, %v273
        %s276 = scalar_lea.vmem [#allocation2], 2
        %v277 = vld [vmem:[%s276] ss:$4 sm:$0xf]
        %278 = vxpose.xlu0.b32.start [1/16] %v277, 128
        %279 = vxpose.xlu0.b32.cont [2/16] 0.0, 128
        %280 = vxpose.xlu0.b32.cont [3/16] 0.0, 128
        %281 = vxpose.xlu0.b32.cont [4/16] 0.0, 128
        %282 = vxpose.xlu0.b32.cont [5/16] 0.0, 128
        %283 = vxpose.xlu0.b32.cont [6/16] 0.0, 128
        %284 = vxpose.xlu0.b32.cont [7/16] 0.0, 128
        %285 = vxpose.xlu0.b32.cont [8/16] 0.0, 128
        %286 = vxpose.xlu0.b32.cont [9/16] 0.0, 128
        %287 = vxpose.xlu0.b32.cont [10/16] 0.0, 128
        %288 = vxpose.xlu0.b32.cont [11/16] 0.0, 128
        %289 = vxpose.xlu0.b32.cont [12/16] 0.0, 128
        %290 = vxpose.xlu0.b32.cont [13/16] 0.0, 128
        %291 = vxpose.xlu0.b32.cont [14/16] 0.0, 128
        %292 = vxpose.xlu0.b32.cont [15/16] 0.0, 128
        %293 = vxpose.xlu0.b32.end [16/16] 0.0, 128
        %v294 = vpop.trf.xlu0
        %v295 = vpop.trf.xlu0
        %v296 = vpop.trf.xlu0
        %v297 = vpop.trf.xlu0
        %v298 = vpop.trf.xlu0
        %v299 = vpop.trf.xlu0
        %v300 = vpop.trf.xlu0
        %v301 = vpop.trf.xlu0
        %v302 = vpop.trf.xlu0
        %v303 = vpop.trf.xlu0
        %v304 = vpop.trf.xlu0
        %v305 = vpop.trf.xlu0
        %v306 = vpop.trf.xlu0
        %v307 = vpop.trf.xlu0
        %v308 = vpop.trf.xlu0
        %v309 = vpop.trf.xlu0
        %310 = vst.msk [vmem:[#allocation3 + $0x8] sm:$0xf] %vm208, %v294
        %312 = vrot.lane.b32.xlu0 %v294, 4
        %v313 = vpop.permute.xlu0 %312
        %315 = vst.msk [vmem:[#allocation3 + $0x4] sm:$0xf0] %vm214, %v313
        %317 = vrot.lane.b32.xlu0 %v295, 8
        %v318 = vpop.permute.xlu0 %317
        %320 = vst.msk [vmem:[#allocation3 + $0x8] sm:$0xf] %vm220, %v318
        %321 = vrot.lane.b32.xlu0 %v295, 12
        %v322 = vpop.permute.xlu0 %321
        %324 = vst.msk [vmem:[#allocation3 + $0x4] sm:$0xf0] %vm225, %v322
        %s325 = scalar_lea.vmem [#allocation2], 3
        %v326 = vld [vmem:[%s325] ss:$4 sm:$0xf]
        %327 = vxpose.xlu0.b32.start [1/16] %v326, 128
        %328 = vxpose.xlu0.b32.cont [2/16] 0.0, 128
        %329 = vxpose.xlu0.b32.cont [3/16] 0.0, 128
        %330 = vxpose.xlu0.b32.cont [4/16] 0.0, 128
        %331 = vxpose.xlu0.b32.cont [5/16] 0.0, 128
        %332 = vxpose.xlu0.b32.cont [6/16] 0.0, 128
        %333 = vxpose.xlu0.b32.cont [7/16] 0.0, 128
        %334 = vxpose.xlu0.b32.cont [8/16] 0.0, 128
        %335 = vxpose.xlu0.b32.cont [9/16] 0.0, 128
        %336 = vxpose.xlu0.b32.cont [10/16] 0.0, 128
        %337 = vxpose.xlu0.b32.cont [11/16] 0.0, 128
        %338 = vxpose.xlu0.b32.cont [12/16] 0.0, 128
        %339 = vxpose.xlu0.b32.cont [13/16] 0.0, 128
        %340 = vxpose.xlu0.b32.cont [14/16] 0.0, 128
        %341 = vxpose.xlu0.b32.cont [15/16] 0.0, 128
        %342 = vxpose.xlu0.b32.end [16/16] 0.0, 128
        %v343 = vpop.trf.xlu0
        %v344 = vpop.trf.xlu0
        %v345 = vpop.trf.xlu0
        %v346 = vpop.trf.xlu0
        %v347 = vpop.trf.xlu0
        %v348 = vpop.trf.xlu0
        %v349 = vpop.trf.xlu0
        %v350 = vpop.trf.xlu0
        %v351 = vpop.trf.xlu0
        %v352 = vpop.trf.xlu0
        %v353 = vpop.trf.xlu0
        %v354 = vpop.trf.xlu0
        %v355 = vpop.trf.xlu0
        %v356 = vpop.trf.xlu0
        %v357 = vpop.trf.xlu0
        %v358 = vpop.trf.xlu0
        %359 = vst.msk [vmem:[#allocation3 + $0xc] sm:$0xf] %vm208, %v343
        %361 = vrot.lane.b32.xlu0 %v343, 4
        %v362 = vpop.permute.xlu0 %361
        %364 = vst.msk [vmem:[#allocation3 + $0x8] sm:$0xf0] %vm214, %v362
        %366 = vrot.lane.b32.xlu0 %v344, 8
        %v367 = vpop.permute.xlu0 %366
        %369 = vst.msk [vmem:[#allocation3 + $0xc] sm:$0xf] %vm220, %v367
        %370 = vrot.lane.b32.xlu0 %v344, 12
        %v371 = vpop.permute.xlu0 %370
        %373 = vst.msk [vmem:[#allocation3 + $0x8] sm:$0xf0] %vm225, %v371
        %v374 = vld [vmem:[#allocation3] ss:$4 sm:$0xf]
        %vm375 = vcmask 125952
        %376 = vst.msk [vmem:[%s135] sm:$0xf] %vm375, %v374
        %s377 = scalar_lea.vmem [#allocation3], 1
        %v378 = vld [vmem:[%s377] ss:$4 sm:$0xf]
        %379 = vst.msk [vmem:[%s135 + $0x4] sm:$0xf] %vm375, %v378
        %s380 = scalar_lea.vmem [#allocation3], 2
        %v381 = vld [vmem:[%s380] ss:$4 sm:$0xf]
        %382 = vst.msk [vmem:[%s135 + $0x8] sm:$0xf] %vm375, %v381
        %s383 = scalar_lea.vmem [#allocation3], 3
        %v384 = vld [vmem:[%s383] ss:$4 sm:$0xf]
        %385 = vst.msk [vmem:[%s135 + $0xc] sm:$0xf] %vm375, %v384
        %s386 = scalar_lea.vmem %s117, 16 [#allocation4]
        %v387 = vld [vmem:[%s386] sm:$0xff]
        %v388 = vld [vmem:[%s386 + $0x8] sm:$0xff]
        %389 = vxpose.xlu0.b32.start [1/16] %v387, 128
        %390 = vxpose.xlu0.b32.cont [2/16] %v388, 128
        %391 = vxpose.xlu0.b32.cont [3/16] 0.0, 128
        %392 = vxpose.xlu0.b32.cont [4/16] 0.0, 128
        %393 = vxpose.xlu0.b32.cont [5/16] 0.0, 128
        %394 = vxpose.xlu0.b32.cont [6/16] 0.0, 128
        %395 = vxpose.xlu0.b32.cont [7/16] 0.0, 128
        %396 = vxpose.xlu0.b32.cont [8/16] 0.0, 128
        %397 = vxpose.xlu0.b32.cont [9/16] 0.0, 128
        %398 = vxpose.xlu0.b32.cont [10/16] 0.0, 128
        %399 = vxpose.xlu0.b32.cont [11/16] 0.0, 128
        %400 = vxpose.xlu0.b32.cont [12/16] 0.0, 128
        %401 = vxpose.xlu0.b32.cont [13/16] 0.0, 128
        %402 = vxpose.xlu0.b32.cont [14/16] 0.0, 128
        %403 = vxpose.xlu0.b32.cont [15/16] 0.0, 128
        %404 = vxpose.xlu0.b32.end [16/16] 0.0, 128
        %v405 = vpop.trf.xlu0
        %v406 = vpop.trf.xlu0
        %v407 = vpop.trf.xlu0
        %v408 = vpop.trf.xlu0
        %v409 = vpop.trf.xlu0
        %v410 = vpop.trf.xlu0
        %v411 = vpop.trf.xlu0
        %v412 = vpop.trf.xlu0
        %v413 = vpop.trf.xlu0
        %v414 = vpop.trf.xlu0
        %v415 = vpop.trf.xlu0
        %v416 = vpop.trf.xlu0
        %v417 = vpop.trf.xlu0
        %v418 = vpop.trf.xlu0
        %v419 = vpop.trf.xlu0
        %v420 = vpop.trf.xlu0
        %421 = vst.msk [vmem:[#allocation2] sm:$0xff] %vm172, %v405
        %422 = vst.msk [vmem:[#allocation2 + $0x8] sm:$0xff] %vm172, %v406
        %v423 = vld [vmem:[#allocation2] ss:$4 sm:$0xf]
        %424 = vxpose.xlu0.b32.start [1/16] %v423, 128
        %425 = vxpose.xlu0.b32.cont [2/16] 0.0, 128
        %426 = vxpose.xlu0.b32.cont [3/16] 0.0, 128
        %427 = vxpose.xlu0.b32.cont [4/16] 0.0, 128
        %428 = vxpose.xlu0.b32.cont [5/16] 0.0, 128
        %429 = vxpose.xlu0.b32.cont [6/16] 0.0, 128
        %430 = vxpose.xlu0.b32.cont [7/16] 0.0, 128
        %431 = vxpose.xlu0.b32.cont [8/16] 0.0, 128
        %432 = vxpose.xlu0.b32.cont [9/16] 0.0, 128
        %433 = vxpose.xlu0.b32.cont [10/16] 0.0, 128
        %434 = vxpose.xlu0.b32.cont [11/16] 0.0, 128
        %435 = vxpose.xlu0.b32.cont [12/16] 0.0, 128
        %436 = vxpose.xlu0.b32.cont [13/16] 0.0, 128
        %437 = vxpose.xlu0.b32.cont [14/16] 0.0, 128
        %438 = vxpose.xlu0.b32.cont [15/16] 0.0, 128
        %439 = vxpose.xlu0.b32.end [16/16] 0.0, 128
        %v440 = vpop.trf.xlu0
        %v441 = vpop.trf.xlu0
        %v442 = vpop.trf.xlu0
        %v443 = vpop.trf.xlu0
        %v444 = vpop.trf.xlu0
        %v445 = vpop.trf.xlu0
        %v446 = vpop.trf.xlu0
        %v447 = vpop.trf.xlu0
        %v448 = vpop.trf.xlu0
        %v449 = vpop.trf.xlu0
        %v450 = vpop.trf.xlu0
        %v451 = vpop.trf.xlu0
        %v452 = vpop.trf.xlu0
        %v453 = vpop.trf.xlu0
        %v454 = vpop.trf.xlu0
        %v455 = vpop.trf.xlu0
        %456 = vst.msk [vmem:[#allocation3] sm:$0xf] %vm208, %v440
        %458 = vrot.lane.b32.xlu0 %v440, 4
        %v459 = vpop.permute.xlu0 %458
        %461 = vst.msk [vmem:[#allocation3 - $0x4] sm:$0xf0] %vm214, %v459
        %463 = vrot.lane.b32.xlu0 %v441, 8
        %v464 = vpop.permute.xlu0 %463
        %466 = vst.msk [vmem:[#allocation3] sm:$0xf] %vm220, %v464
        %467 = vrot.lane.b32.xlu0 %v441, 12
        %v468 = vpop.permute.xlu0 %467
        %470 = vst.msk [vmem:[#allocation3 - $0x4] sm:$0xf0] %vm225, %v468
        %v471 = vld [vmem:[%s227] ss:$4 sm:$0xf]
        %472 = vxpose.xlu0.b32.start [1/16] %v471, 128
        %473 = vxpose.xlu0.b32.cont [2/16] 0.0, 128
        %474 = vxpose.xlu0.b32.cont [3/16] 0.0, 128
        %475 = vxpose.xlu0.b32.cont [4/16] 0.0, 128
        %476 = vxpose.xlu0.b32.cont [5/16] 0.0, 128
        %477 = vxpose.xlu0.b32.cont [6/16] 0.0, 128
        %478 = vxpose.xlu0.b32.cont [7/16] 0.0, 128
        %479 = vxpose.xlu0.b32.cont [8/16] 0.0, 128
        %480 = vxpose.xlu0.b32.cont [9/16] 0.0, 128
        %481 = vxpose.xlu0.b32.cont [10/16] 0.0, 128
        %482 = vxpose.xlu0.b32.cont [11/16] 0.0, 128
        %483 = vxpose.xlu0.b32.cont [12/16] 0.0, 128
        %484 = vxpose.xlu0.b32.cont [13/16] 0.0, 128
        %485 = vxpose.xlu0.b32.cont [14/16] 0.0, 128
        %486 = vxpose.xlu0.b32.cont [15/16] 0.0, 128
        %487 = vxpose.xlu0.b32.end [16/16] 0.0, 128
        %v488 = vpop.trf.xlu0
        %v489 = vpop.trf.xlu0
        %v490 = vpop.trf.xlu0
        %v491 = vpop.trf.xlu0
        %v492 = vpop.trf.xlu0
        %v493 = vpop.trf.xlu0
        %v494 = vpop.trf.xlu0
        %v495 = vpop.trf.xlu0
        %v496 = vpop.trf.xlu0
        %v497 = vpop.trf.xlu0
        %v498 = vpop.trf.xlu0
        %v499 = vpop.trf.xlu0
        %v500 = vpop.trf.xlu0
        %v501 = vpop.trf.xlu0
        %v502 = vpop.trf.xlu0
        %v503 = vpop.trf.xlu0
        %504 = vst.msk [vmem:[#allocation3 + $0x4] sm:$0xf] %vm208, %v488
        %506 = vrot.lane.b32.xlu0 %v488, 4
        %v507 = vpop.permute.xlu0 %506
        %509 = vst.msk [vmem:[#allocation3] sm:$0xf0] %vm214, %v507
        %511 = vrot.lane.b32.xlu0 %v489, 8
        %v512 = vpop.permute.xlu0 %511
        %514 = vst.msk [vmem:[#allocation3 + $0x4] sm:$0xf] %vm220, %v512
        %515 = vrot.lane.b32.xlu0 %v489, 12
        %v516 = vpop.permute.xlu0 %515
        %518 = vst.msk [vmem:[#allocation3] sm:$0xf0] %vm225, %v516
        %v519 = vld [vmem:[%s276] ss:$4 sm:$0xf]
        %520 = vxpose.xlu0.b32.start [1/16] %v519, 128
        %521 = vxpose.xlu0.b32.cont [2/16] 0.0, 128
        %522 = vxpose.xlu0.b32.cont [3/16] 0.0, 128
        %523 = vxpose.xlu0.b32.cont [4/16] 0.0, 128
        %524 = vxpose.xlu0.b32.cont [5/16] 0.0, 128
        %525 = vxpose.xlu0.b32.cont [6/16] 0.0, 128
        %526 = vxpose.xlu0.b32.cont [7/16] 0.0, 128
        %527 = vxpose.xlu0.b32.cont [8/16] 0.0, 128
        %528 = vxpose.xlu0.b32.cont [9/16] 0.0, 128
        %529 = vxpose.xlu0.b32.cont [10/16] 0.0, 128
        %530 = vxpose.xlu0.b32.cont [11/16] 0.0, 128
        %531 = vxpose.xlu0.b32.cont [12/16] 0.0, 128
        %532 = vxpose.xlu0.b32.cont [13/16] 0.0, 128
        %533 = vxpose.xlu0.b32.cont [14/16] 0.0, 128
        %534 = vxpose.xlu0.b32.cont [15/16] 0.0, 128
        %535 = vxpose.xlu0.b32.end [16/16] 0.0, 128
        %v536 = vpop.trf.xlu0
        %v537 = vpop.trf.xlu0
        %v538 = vpop.trf.xlu0
        %v539 = vpop.trf.xlu0
        %v540 = vpop.trf.xlu0
        %v541 = vpop.trf.xlu0
        %v542 = vpop.trf.xlu0
        %v543 = vpop.trf.xlu0
        %v544 = vpop.trf.xlu0
        %v545 = vpop.trf.xlu0
        %v546 = vpop.trf.xlu0
        %v547 = vpop.trf.xlu0
        %v548 = vpop.trf.xlu0
        %v549 = vpop.trf.xlu0
        %v550 = vpop.trf.xlu0
        %v551 = vpop.trf.xlu0
        %552 = vst.msk [vmem:[#allocation3 + $0x8] sm:$0xf] %vm208, %v536
        %554 = vrot.lane.b32.xlu0 %v536, 4
        %v555 = vpop.permute.xlu0 %554
        %557 = vst.msk [vmem:[#allocation3 + $0x4] sm:$0xf0] %vm214, %v555
        %559 = vrot.lane.b32.xlu0 %v537, 8
        %v560 = vpop.permute.xlu0 %559
        %562 = vst.msk [vmem:[#allocation3 + $0x8] sm:$0xf] %vm220, %v560
        %563 = vrot.lane.b32.xlu0 %v537, 12
        %v564 = vpop.permute.xlu0 %563
        %566 = vst.msk [vmem:[#allocation3 + $0x4] sm:$0xf0] %vm225, %v564
        %v567 = vld [vmem:[%s325] ss:$4 sm:$0xf]
        %568 = vxpose.xlu0.b32.start [1/16] %v567, 128
        %569 = vxpose.xlu0.b32.cont [2/16] 0.0, 128
        %570 = vxpose.xlu0.b32.cont [3/16] 0.0, 128
        %571 = vxpose.xlu0.b32.cont [4/16] 0.0, 128
        %572 = vxpose.xlu0.b32.cont [5/16] 0.0, 128
        %573 = vxpose.xlu0.b32.cont [6/16] 0.0, 128
        %574 = vxpose.xlu0.b32.cont [7/16] 0.0, 128
        %575 = vxpose.xlu0.b32.cont [8/16] 0.0, 128
        %576 = vxpose.xlu0.b32.cont [9/16] 0.0, 128
        %577 = vxpose.xlu0.b32.cont [10/16] 0.0, 128
        %578 = vxpose.xlu0.b32.cont [11/16] 0.0, 128
        %579 = vxpose.xlu0.b32.cont [12/16] 0.0, 128
        %580 = vxpose.xlu0.b32.cont [13/16] 0.0, 128
        %581 = vxpose.xlu0.b32.cont [14/16] 0.0, 128
        %582 = vxpose.xlu0.b32.cont [15/16] 0.0, 128
        %583 = vxpose.xlu0.b32.end [16/16] 0.0, 128
        %v584 = vpop.trf.xlu0
        %v585 = vpop.trf.xlu0
        %v586 = vpop.trf.xlu0
        %v587 = vpop.trf.xlu0
        %v588 = vpop.trf.xlu0
        %v589 = vpop.trf.xlu0
        %v590 = vpop.trf.xlu0
        %v591 = vpop.trf.xlu0
        %v592 = vpop.trf.xlu0
        %v593 = vpop.trf.xlu0
        %v594 = vpop.trf.xlu0
        %v595 = vpop.trf.xlu0
        %v596 = vpop.trf.xlu0
        %v597 = vpop.trf.xlu0
        %v598 = vpop.trf.xlu0
        %v599 = vpop.trf.xlu0
        %600 = vst.msk [vmem:[#allocation3 + $0xc] sm:$0xf] %vm208, %v584
        %602 = vrot.lane.b32.xlu0 %v584, 4
        %v603 = vpop.permute.xlu0 %602
        %605 = vst.msk [vmem:[#allocation3 + $0x8] sm:$0xf0] %vm214, %v603
        %607 = vrot.lane.b32.xlu0 %v585, 8
        %v608 = vpop.permute.xlu0 %607
        %610 = vst.msk [vmem:[#allocation3 + $0xc] sm:$0xf] %vm220, %v608
        %611 = vrot.lane.b32.xlu0 %v585, 12
        %v612 = vpop.permute.xlu0 %611
        %614 = vst.msk [vmem:[#allocation3 + $0x8] sm:$0xf0] %vm225, %v612
        %v615 = vld [vmem:[#allocation3] ss:$4 sm:$0xf]
        %s616 = scalar_lea.vmem %s135, 16 [#allocation7]
        %617 = vst.msk [vmem:[%s616] sm:$0xf] %vm375, %v615
        %v618 = vld [vmem:[%s377] ss:$4 sm:$0xf]
        %619 = vst.msk [vmem:[%s616 + $0x4] sm:$0xf] %vm375, %v618
        %v620 = vld [vmem:[%s380] ss:$4 sm:$0xf]
        %621 = vst.msk [vmem:[%s616 + $0x8] sm:$0xf] %vm375, %v620
        %v622 = vld [vmem:[%s383] ss:$4 sm:$0xf]
        %623 = vst.msk [vmem:[%s616 + $0xc] sm:$0xf] %vm375, %v622
        %s624 = scalar_lea.vmem %s117, 32 [#allocation4]
        %v625 = vld [vmem:[%s624] sm:$0xff]
        %v626 = vld [vmem:[%s624 + $0x8] sm:$0xff]
        %627 = vxpose.xlu0.b32.start [1/16] %v625, 128
        %628 = vxpose.xlu0.b32.cont [2/16] %v626, 128
        %629 = vxpose.xlu0.b32.cont [3/16] 0.0, 128
        %630 = vxpose.xlu0.b32.cont [4/16] 0.0, 128
        %631 = vxpose.xlu0.b32.cont [5/16] 0.0, 128
        %632 = vxpose.xlu0.b32.cont [6/16] 0.0, 128
        %633 = vxpose.xlu0.b32.cont [7/16] 0.0, 128
        %634 = vxpose.xlu0.b32.cont [8/16] 0.0, 128
        %635 = vxpose.xlu0.b32.cont [9/16] 0.0, 128
        %636 = vxpose.xlu0.b32.cont [10/16] 0.0, 128
        %637 = vxpose.xlu0.b32.cont [11/16] 0.0, 128
        %638 = vxpose.xlu0.b32.cont [12/16] 0.0, 128
        %639 = vxpose.xlu0.b32.cont [13/16] 0.0, 128
        %640 = vxpose.xlu0.b32.cont [14/16] 0.0, 128
        %641 = vxpose.xlu0.b32.cont [15/16] 0.0, 128
        %642 = vxpose.xlu0.b32.end [16/16] 0.0, 128
        %v643 = vpop.trf.xlu0
        %v644 = vpop.trf.xlu0
        %v645 = vpop.trf.xlu0
        %v646 = vpop.trf.xlu0
        %v647 = vpop.trf.xlu0
        %v648 = vpop.trf.xlu0
        %v649 = vpop.trf.xlu0
        %v650 = vpop.trf.xlu0
        %v651 = vpop.trf.xlu0
        %v652 = vpop.trf.xlu0
        %v653 = vpop.trf.xlu0
        %v654 = vpop.trf.xlu0
        %v655 = vpop.trf.xlu0
        %v656 = vpop.trf.xlu0
        %v657 = vpop.trf.xlu0
        %v658 = vpop.trf.xlu0
        %659 = vst.msk [vmem:[#allocation2] sm:$0xff] %vm172, %v643
        %660 = vst.msk [vmem:[#allocation2 + $0x8] sm:$0xff] %vm172, %v644
        %v661 = vld [vmem:[#allocation2] ss:$4 sm:$0xf]
        %662 = vxpose.xlu0.b32.start [1/16] %v661, 128
        %663 = vxpose.xlu0.b32.cont [2/16] 0.0, 128
        %664 = vxpose.xlu0.b32.cont [3/16] 0.0, 128
        %665 = vxpose.xlu0.b32.cont [4/16] 0.0, 128
        %666 = vxpose.xlu0.b32.cont [5/16] 0.0, 128
        %667 = vxpose.xlu0.b32.cont [6/16] 0.0, 128
        %668 = vxpose.xlu0.b32.cont [7/16] 0.0, 128
        %669 = vxpose.xlu0.b32.cont [8/16] 0.0, 128
        %670 = vxpose.xlu0.b32.cont [9/16] 0.0, 128
        %671 = vxpose.xlu0.b32.cont [10/16] 0.0, 128
        %672 = vxpose.xlu0.b32.cont [11/16] 0.0, 128
        %673 = vxpose.xlu0.b32.cont [12/16] 0.0, 128
        %674 = vxpose.xlu0.b32.cont [13/16] 0.0, 128
        %675 = vxpose.xlu0.b32.cont [14/16] 0.0, 128
        %676 = vxpose.xlu0.b32.cont [15/16] 0.0, 128
        %677 = vxpose.xlu0.b32.end [16/16] 0.0, 128
        %v678 = vpop.trf.xlu0
        %v679 = vpop.trf.xlu0
        %v680 = vpop.trf.xlu0
        %v681 = vpop.trf.xlu0
        %v682 = vpop.trf.xlu0
        %v683 = vpop.trf.xlu0
        %v684 = vpop.trf.xlu0
        %v685 = vpop.trf.xlu0
        %v686 = vpop.trf.xlu0
        %v687 = vpop.trf.xlu0
        %v688 = vpop.trf.xlu0
        %v689 = vpop.trf.xlu0
        %v690 = vpop.trf.xlu0
        %v691 = vpop.trf.xlu0
        %v692 = vpop.trf.xlu0
        %v693 = vpop.trf.xlu0
        %694 = vst.msk [vmem:[#allocation3] sm:$0xf] %vm208, %v678
        %696 = vrot.lane.b32.xlu0 %v678, 4
        %v697 = vpop.permute.xlu0 %696
        %699 = vst.msk [vmem:[#allocation3 - $0x4] sm:$0xf0] %vm214, %v697
        %701 = vrot.lane.b32.xlu0 %v679, 8
        %v702 = vpop.permute.xlu0 %701
        %704 = vst.msk [vmem:[#allocation3] sm:$0xf] %vm220, %v702
        %705 = vrot.lane.b32.xlu0 %v679, 12
        %v706 = vpop.permute.xlu0 %705
        %708 = vst.msk [vmem:[#allocation3 - $0x4] sm:$0xf0] %vm225, %v706
        %v709 = vld [vmem:[%s227] ss:$4 sm:$0xf]
        %710 = vxpose.xlu0.b32.start [1/16] %v709, 128
        %711 = vxpose.xlu0.b32.cont [2/16] 0.0, 128
        %712 = vxpose.xlu0.b32.cont [3/16] 0.0, 128
        %713 = vxpose.xlu0.b32.cont [4/16] 0.0, 128
        %714 = vxpose.xlu0.b32.cont [5/16] 0.0, 128
        %715 = vxpose.xlu0.b32.cont [6/16] 0.0, 128
        %716 = vxpose.xlu0.b32.cont [7/16] 0.0, 128
        %717 = vxpose.xlu0.b32.cont [8/16] 0.0, 128
        %718 = vxpose.xlu0.b32.cont [9/16] 0.0, 128
        %719 = vxpose.xlu0.b32.cont [10/16] 0.0, 128
        %720 = vxpose.xlu0.b32.cont [11/16] 0.0, 128
        %721 = vxpose.xlu0.b32.cont [12/16] 0.0, 128
        %722 = vxpose.xlu0.b32.cont [13/16] 0.0, 128
        %723 = vxpose.xlu0.b32.cont [14/16] 0.0, 128
        %724 = vxpose.xlu0.b32.cont [15/16] 0.0, 128
        %725 = vxpose.xlu0.b32.end [16/16] 0.0, 128
        %v726 = vpop.trf.xlu0
        %v727 = vpop.trf.xlu0
        %v728 = vpop.trf.xlu0
        %v729 = vpop.trf.xlu0
        %v730 = vpop.trf.xlu0
        %v731 = vpop.trf.xlu0
        %v732 = vpop.trf.xlu0
        %v733 = vpop.trf.xlu0
        %v734 = vpop.trf.xlu0
        %v735 = vpop.trf.xlu0
        %v736 = vpop.trf.xlu0
        %v737 = vpop.trf.xlu0
        %v738 = vpop.trf.xlu0
        %v739 = vpop.trf.xlu0
        %v740 = vpop.trf.xlu0
        %v741 = vpop.trf.xlu0
        %742 = vst.msk [vmem:[#allocation3 + $0x4] sm:$0xf] %vm208, %v726
        %744 = vrot.lane.b32.xlu0 %v726, 4
        %v745 = vpop.permute.xlu0 %744
        %747 = vst.msk [vmem:[#allocation3] sm:$0xf0] %vm214, %v745
        %749 = vrot.lane.b32.xlu0 %v727, 8
        %v750 = vpop.permute.xlu0 %749
        %752 = vst.msk [vmem:[#allocation3 + $0x4] sm:$0xf] %vm220, %v750
        %753 = vrot.lane.b32.xlu0 %v727, 12
        %v754 = vpop.permute.xlu0 %753
        %756 = vst.msk [vmem:[#allocation3] sm:$0xf0] %vm225, %v754
        %v757 = vld [vmem:[%s276] ss:$4 sm:$0xf]
        %758 = vxpose.xlu0.b32.start [1/16] %v757, 128
        %759 = vxpose.xlu0.b32.cont [2/16] 0.0, 128
        %760 = vxpose.xlu0.b32.cont [3/16] 0.0, 128
        %761 = vxpose.xlu0.b32.cont [4/16] 0.0, 128
        %762 = vxpose.xlu0.b32.cont [5/16] 0.0, 128
        %763 = vxpose.xlu0.b32.cont [6/16] 0.0, 128
        %764 = vxpose.xlu0.b32.cont [7/16] 0.0, 128
        %765 = vxpose.xlu0.b32.cont [8/16] 0.0, 128
        %766 = vxpose.xlu0.b32.cont [9/16] 0.0, 128
        %767 = vxpose.xlu0.b32.cont [10/16] 0.0, 128
        %768 = vxpose.xlu0.b32.cont [11/16] 0.0, 128
        %769 = vxpose.xlu0.b32.cont [12/16] 0.0, 128
        %770 = vxpose.xlu0.b32.cont [13/16] 0.0, 128
        %771 = vxpose.xlu0.b32.cont [14/16] 0.0, 128
        %772 = vxpose.xlu0.b32.cont [15/16] 0.0, 128
        %773 = vxpose.xlu0.b32.end [16/16] 0.0, 128
        %v774 = vpop.trf.xlu0
        %v775 = vpop.trf.xlu0
        %v776 = vpop.trf.xlu0
        %v777 = vpop.trf.xlu0
        %v778 = vpop.trf.xlu0
        %v779 = vpop.trf.xlu0
        %v780 = vpop.trf.xlu0
        %v781 = vpop.trf.xlu0
        %v782 = vpop.trf.xlu0
        %v783 = vpop.trf.xlu0
        %v784 = vpop.trf.xlu0
        %v785 = vpop.trf.xlu0
        %v786 = vpop.trf.xlu0
        %v787 = vpop.trf.xlu0
        %v788 = vpop.trf.xlu0
        %v789 = vpop.trf.xlu0
        %790 = vst.msk [vmem:[#allocation3 + $0x8] sm:$0xf] %vm208, %v774
        %792 = vrot.lane.b32.xlu0 %v774, 4
        %v793 = vpop.permute.xlu0 %792
        %795 = vst.msk [vmem:[#allocation3 + $0x4] sm:$0xf0] %vm214, %v793
        %797 = vrot.lane.b32.xlu0 %v775, 8
        %v798 = vpop.permute.xlu0 %797
        %800 = vst.msk [vmem:[#allocation3 + $0x8] sm:$0xf] %vm220, %v798
        %801 = vrot.lane.b32.xlu0 %v775, 12
        %v802 = vpop.permute.xlu0 %801
        %804 = vst.msk [vmem:[#allocation3 + $0x4] sm:$0xf0] %vm225, %v802
        %v805 = vld [vmem:[%s325] ss:$4 sm:$0xf]
        %806 = vxpose.xlu0.b32.start [1/16] %v805, 128
        %807 = vxpose.xlu0.b32.cont [2/16] 0.0, 128
        %808 = vxpose.xlu0.b32.cont [3/16] 0.0, 128
        %809 = vxpose.xlu0.b32.cont [4/16] 0.0, 128
        %810 = vxpose.xlu0.b32.cont [5/16] 0.0, 128
        %811 = vxpose.xlu0.b32.cont [6/16] 0.0, 128
        %812 = vxpose.xlu0.b32.cont [7/16] 0.0, 128
        %813 = vxpose.xlu0.b32.cont [8/16] 0.0, 128
        %814 = vxpose.xlu0.b32.cont [9/16] 0.0, 128
        %815 = vxpose.xlu0.b32.cont [10/16] 0.0, 128
        %816 = vxpose.xlu0.b32.cont [11/16] 0.0, 128
        %817 = vxpose.xlu0.b32.cont [12/16] 0.0, 128
        %818 = vxpose.xlu0.b32.cont [13/16] 0.0, 128
        %819 = vxpose.xlu0.b32.cont [14/16] 0.0, 128
        %820 = vxpose.xlu0.b32.cont [15/16] 0.0, 128
        %821 = vxpose.xlu0.b32.end [16/16] 0.0, 128
        %v822 = vpop.trf.xlu0
        %v823 = vpop.trf.xlu0
        %v824 = vpop.trf.xlu0
        %v825 = vpop.trf.xlu0
        %v826 = vpop.trf.xlu0
        %v827 = vpop.trf.xlu0
        %v828 = vpop.trf.xlu0
        %v829 = vpop.trf.xlu0
        %v830 = vpop.trf.xlu0
        %v831 = vpop.trf.xlu0
        %v832 = vpop.trf.xlu0
        %v833 = vpop.trf.xlu0
        %v834 = vpop.trf.xlu0
        %v835 = vpop.trf.xlu0
        %v836 = vpop.trf.xlu0
        %v837 = vpop.trf.xlu0
        %838 = vst.msk [vmem:[#allocation3 + $0xc] sm:$0xf] %vm208, %v822
        %840 = vrot.lane.b32.xlu0 %v822, 4
        %v841 = vpop.permute.xlu0 %840
        %843 = vst.msk [vmem:[#allocation3 + $0x8] sm:$0xf0] %vm214, %v841
        %845 = vrot.lane.b32.xlu0 %v823, 8
        %v846 = vpop.permute.xlu0 %845
        %848 = vst.msk [vmem:[#allocation3 + $0xc] sm:$0xf] %vm220, %v846
        %849 = vrot.lane.b32.xlu0 %v823, 12
        %v850 = vpop.permute.xlu0 %849
        %852 = vst.msk [vmem:[#allocation3 + $0x8] sm:$0xf0] %vm225, %v850
        %v853 = vld [vmem:[#allocation3] ss:$4 sm:$0xf]
        %s854 = scalar_lea.vmem %s135, 32 [#allocation7]
        %855 = vst.msk [vmem:[%s854] sm:$0xf] %vm375, %v853
        %v856 = vld [vmem:[%s377] ss:$4 sm:$0xf]
        %857 = vst.msk [vmem:[%s854 + $0x4] sm:$0xf] %vm375, %v856
        %v858 = vld [vmem:[%s380] ss:$4 sm:$0xf]
        %859 = vst.msk [vmem:[%s854 + $0x8] sm:$0xf] %vm375, %v858
        %v860 = vld [vmem:[%s383] ss:$4 sm:$0xf]
        %861 = vst.msk [vmem:[%s854 + $0xc] sm:$0xf] %vm375, %v860
        %s862 = sand.u32 %s52, 1
        %s863 = scalar_lea.sflag [#allocation6], %s862
        %s864 = sand.u32 %s52, 1
        %s865 = smul.addr %s864, 48
        %s866 = scalar_lea.vmem [#allocation7], %s865
        // Predicated region
        $region29: #{tpu_custom_call.1} parent=23 // pred_check
          %p867 = pneg %p62
        $region30: #{tpu_custom_call.1} parent=23 // pred_check_branch
          %869 = sbr.rel (%p867) target = $region32
        $region31: #{tpu_custom_call.1} parent=23 // pred_region
          %s870 = smul.u32 3, %s18
          %s872 = ssub.s32 768, 768
          %873 = vsyncadd %s863, %s872
          %s874 = smul.addr %s870, 2
          %s875 = smul.addr %s874, 128
          %s876 = scalar_lea.hbm %s1, %s875
          %s877 = sshll.u32 %s866, 4
          %s878 = int_to_ptr.vmem [resolvable:$true] %s877
          %883 = dma.vmem_to_hbm [thread:$0]  %s878, 768, %s876, %s863, 128, 128, 8
        $region32: #{tpu_custom_call.1} parent=23 // pred_fallthru
          _
      $region24: #{tpu_custom_call.1} parent=5 // pred_fallthru
        _
      %p884 = scmp.le.s32.totalorder 2, %s13
      // Predicated region
      $region33: #{tpu_custom_call.1} parent=5 // pred_check
        %p885 = pneg %p884
      $region34: #{tpu_custom_call.1} parent=5 // pred_check_branch
        %887 = sbr.rel (%p885) target = $region36
      $region35: #{tpu_custom_call.1} parent=5 // pred_region
        %s888 = ssub.s32 %s13, 2
        // Predicated region
        $region37: #{tpu_custom_call.1} parent=35 // pred_check
          %p889 = pneg %p68
        $region38: #{tpu_custom_call.1} parent=35 // pred_check_branch
          %891 = sbr.rel (%p889) target = $region40
        $region39: #{tpu_custom_call.1} parent=35 // pred_region
          %s892 = sand.u32 %s53, 1
          %s893 = scalar_lea.sflag [#allocation6], %s892
          %s894 = sand.u32 %s53, 1
          %s895 = smul.addr %s894, 48
          %s896 = scalar_lea.vmem [#allocation7], %s895
          %897 = dma.done %s893, 768
        $region40: #{tpu_custom_call.1} parent=35 // pred_fallthru
          _
      $region36: #{tpu_custom_call.1} parent=5 // pred_fallthru
        _
    $region6: #{tpu_custom_call.1} parent=1 // loop_footer
      %s17 = sadd.s32 1, %s13
    $region7: #{tpu_custom_call.1} parent=1 // loop_footer_branch
      %12 = sbr.rel target = $region3
    $region8: #{tpu_custom_call.1} parent=1 // loop_exit
      _
    %898 = vsyncpa [#allocation5], 1
    %s899 = scalar_lea.sflag [#allocation5], 1
    %900 = vsyncpa %s899, 1
    %901 = vsyncpa [#allocation6], 1
    %s902 = scalar_lea.sflag [#allocation6], 1
    %903 = vsyncpa %s902, 1

</llo_original>
